<compile_context>
chip_gen: v7x
topology: tpu7x:2x2x1
jax: 0.10.0
libtpu: 0.0.40
codegen_flags: <defaults>
</compile_context>

<pallas_src>
import jax
import jax.numpy as jnp
from jax.experimental import pallas as pl
from jax.experimental.pallas import tpu as pltpu

BN_EPS = 1e-5                 # PyTorch BatchNorm2d default
TM_MAX = 2048                 # max M-tile rows (bf16 operands, f32 accum)
LANE = 128


def _cdiv(a, b):
    return -(-a // b)


def _round_up(x, m):
    return _cdiv(x, m) * m


# ----------------------------- Pallas kernels ------------------------------ #

def _gemm_stats_kernel(a_ref, w_ref, out_ref, sum_ref, ssq_ref):
    """Tiled GEMM (bf16 in, f32 accum) + per-tile column sum / sum-of-squares.

    Each grid step writes its own (1, 1, cp) partial-stats block, so all grid
    steps are independent ("parallel" semantics; v7x megacore shards M tiles).
    Zero-padded rows/columns contribute exactly zero to both partials.
    """
    acc = jnp.dot(a_ref[...], w_ref[...], preferred_element_type=jnp.float32)
    out_ref[...] = acc.astype(out_ref.dtype)          # bf16 intermediate to HBM
    col_sum = jnp.sum(acc, axis=0, keepdims=True)     # f32 stats from f32 acc
    col_ssq = jnp.sum(acc * acc, axis=0, keepdims=True)
    sum_ref[...] = col_sum[jnp.newaxis]
    ssq_ref[...] = col_ssq[jnp.newaxis]


def _affine_relu_kernel(x_ref, scale_ref, shift_ref, o_ref):
    """Per-column affine (fused BN scale/shift) + ReLU, tiled over M. bf16 I/O."""
    y = x_ref[...].astype(jnp.float32) * scale_ref[...] + shift_ref[...]
    o_ref[...] = jnp.maximum(y, 0.0).astype(o_ref.dtype)


def _gemm_tanh_kernel(a_ref, w_ref, o_ref):
    acc = jnp.dot(a_ref[...], w_ref[...], preferred_element_type=jnp.float32)
    o_ref[...] = jnp.tanh(acc).astype(o_ref.dtype)


# ------------------------------ tiling helpers ------------------------------ #

def _plan_m(m, k, cp):
    """Balanced M tiling: largest tile <= TM_MAX (and <= a per-step byte cap),
    then split M as evenly as possible (multiple of 16 for bf16 sublane pack)."""
    bytes_per_row = 2 * k + 2 * cp + 4 * cp          # a(bf16) + out(bf16) + f32 acc temp
    cap = max(64, min(TM_MAX, ((8 << 20) // bytes_per_row) // 16 * 16))
    n_tiles = max(1, _cdiv(m, cap))
    tm = _round_up(_cdiv(m, n_tiles), 16)
    m_pad = n_tiles * tm
    return tm, m_pad, n_tiles


def _vmem_limit(tm, k, cp):
    """Per-call VMEM budget from actual block sizes (x2 for double-buffering),
    clamped to stay within v7x's 64 MiB/TC."""
    a_b = tm * k * 2
    w_b = k * cp * 2
    o_b = tm * cp * 2
    acc_b = tm * cp * 4          # f32 accumulator temporary
    st_b = 2 * cp * 4            # sum + ssq blocks
    need = 2 * (a_b + o_b + st_b) + 2 * w_b + 2 * acc_b
    return int(min(max(need + (8 << 20), 16 << 20), 64 << 20))


# ------------------------------ GEMM wrappers ------------------------------- #

def gemm_bn_relu(a, w_col, gamma, beta, n_rep):
    """a: (M, K) bf16; w_col: (K, cp) bf16 with n_rep*C real columns laid out
    (rep-major, channel-minor), zero-padded to lane-dense cp.

    Returns (M, n_rep*C) bf16 after training-mode BatchNorm (full-batch biased
    statistics) + ReLU, matching PyTorch's default forward.
    """
    m_real, k = a.shape
    cp = w_col.shape[1]
    c = gamma.shape[0]
    cols = n_rep * c
    tm, m_pad, n_tiles = _plan_m(m_real, k, cp)
    if m_pad != m_real:
        a = jnp.pad(a, ((0, m_pad - m_real), (0, 0)))
    vmem = _vmem_limit(tm, k, cp)

    out, s_p, ss_p = pl.pallas_call(
        _gemm_stats_kernel,
        out_shape=(jax.ShapeDtypeStruct((m_pad, cp), jnp.bfloat16),
                   jax.ShapeDtypeStruct((n_tiles, 1, cp), jnp.float32),
                   jax.ShapeDtypeStruct((n_tiles, 1, cp), jnp.float32)),
        grid=(n_tiles,),
        in_specs=[pl.BlockSpec((tm, k), lambda i: (i, 0)),      # M-tiled operand
                  pl.BlockSpec((k, cp), lambda i: (0, 0))],     # weight pinned in VMEM
        out_specs=(pl.BlockSpec((tm, cp), lambda i: (i, 0)),
                   pl.BlockSpec((1, 1, cp), lambda i: (i, 0, 0)),   # per-tile partials
                   pl.BlockSpec((1, 1, cp), lambda i: (i, 0, 0))),
        compiler_params=pltpu.CompilerParams(
            dimension_semantics=("parallel",),                  # megacore-shardable
            vmem_limit_bytes=vmem),
    )(a, w_col)

    # Tiny per-channel combine in f32 (partials are (n_tiles, cp)).
    # NOTE: one-pass E[x^2]-E[x]^2 can lose precision if |mean| >> std; fine
    # for generator activations, consider a shifted/Welford combine otherwise.
    cnt = jnp.float32(n_rep * m_real)
    s = jnp.sum(s_p[:, 0, :cols], axis=0)
    ss = jnp.sum(ss_p[:, 0, :cols], axis=0)
    s_c = s.reshape(n_rep, c).sum(axis=0)
    ss_c = ss.reshape(n_rep, c).sum(axis=0)
    mean = s_c / cnt
    var = ss_c / cnt - mean * mean                  # biased variance (PyTorch norm)
    scale_c = gamma * jax.lax.rsqrt(var + BN_EPS)
    shift_c = beta - mean * scale_c
    scale = jnp.pad(jnp.tile(scale_c, n_rep), (0, cp - cols)).reshape(1, cp)
    shift = jnp.pad(jnp.tile(shift_c, n_rep), (0, cp - cols)).reshape(1, cp)

    y = pl.pallas_call(
        _affine_relu_kernel,
        out_shape=jax.ShapeDtypeStruct((m_pad, cp), jnp.bfloat16),
        grid=(n_tiles,),
        in_specs=[pl.BlockSpec((tm, cp), lambda i: (i, 0)),
                  pl.BlockSpec((1, cp), lambda i: (0, 0)),
                  pl.BlockSpec((1, cp), lambda i: (0, 0))],
        out_specs=pl.BlockSpec((tm, cp), lambda i: (i, 0)),
        compiler_params=pltpu.CompilerParams(
            dimension_semantics=("parallel",),
            vmem_limit_bytes=vmem),
    )(out, scale, shift)
    return y[:m_real, :cols]


def gemm_tanh(a, w_col, cols):
    m_real, k = a.shape
    cp = w_col.shape[1]
    tm, m_pad, n_tiles = _plan_m(m_real, k, cp)
    if m_pad != m_real:
        a = jnp.pad(a, ((0, m_pad - m_real), (0, 0)))
    out = pl.pallas_call(
        _gemm_tanh_kernel,
        out_shape=jax.ShapeDtypeStruct((m_pad, cp), jnp.bfloat16),
        grid=(n_tiles,),
        in_specs=[pl.BlockSpec((tm, k), lambda i: (i, 0)),
                  pl.BlockSpec((k, cp), lambda i: (0, 0))],
        out_specs=pl.BlockSpec((tm, cp), lambda i: (i, 0)),
        compiler_params=pltpu.CompilerParams(
            dimension_semantics=("parallel",),
            vmem_limit_bytes=_vmem_limit(tm, k, cp)),
    )(a, w_col)
    return out[:m_real, :cols]


# ------------------------------ plain-JAX glue ------------------------------ #

def _phase_patches(x):
    """3x3-neighbourhood patches for the phase-decomposed stride-2 ConvTranspose.

    x: (N, H, W, C) -> patches (N*H*W, 9*C), tap-major / channel-minor, zero
    padding at the spatial borders."""
    n, h, w, c = x.shape
    xp = jnp.pad(x, ((0, 0), (1, 1), (1, 1), (0, 0)))
    cols = [xp[:, 1 + dy:1 + dy + h, 1 + dx:1 + dx + w, :]
            for dy in (-1, 0, 1) for dx in (-1, 0, 1)]
    return jnp.stack(cols, axis=3).reshape(n * h * w, 9 * c), (n, h, w)


def _interleave_phases(out, n, h, w, c):
    """(N*H*W, 4*C) phase-major output -> (N, 2H, 2W, C)."""
    y = out.reshape(n, h, w, 2, 2, c)
    return jnp.transpose(y, (0, 1, 3, 2, 4, 5)).reshape(n, 2 * h, 2 * w, c)


def _phase_weight(w):
    """PyTorch ConvTranspose2d weight (C_in, C_out, 4, 4), stride=2, pad=1 ->
    (9*C_in, 4*C_out) phase GEMM weight; columns (phase-major, channel-minor),
    phase = py*2 + px; output (2r+py, 2c+px) depends on inputs (r+dy, c+dx)."""
    c_in, c_out = w.shape[0], w.shape[1]
    w9 = jnp.zeros((9, c_in, 4, c_out), jnp.float32)
    for py in range(2):
        for px in range(2):
            phase = py * 2 + px
            for ky in range(4):
                if (ky % 2) != ((1 - py) % 2):
                    continue
                dy = (py + 1 - ky) // 2
                for kx in range(4):
                    if (kx % 2) != ((1 - px) % 2):
                        continue
                    dx = (px + 1 - kx) // 2
                    t = (dy + 1) * 3 + (dx + 1)
                    w9 = w9.at[t, :, phase, :].set(w[:, :, ky, kx])
    return w9.reshape(9 * c_in, 4 * c_out)


def _pick_pack(cols):
    """Pack factor (1/2/4/8/16, always divides H*W>=16) so that pack*cols fills
    the 128-lane output width as far as possible."""
    p = 1
    while p < 16 and (p * 2) * cols <= LANE:
        p *= 2
    return p


def _pack_weight(w_col, pack):
    """Block-diagonal weight: pack consecutive M rows into one GEMM row."""
    if pack == 1:
        return w_col
    return jnp.kron(jnp.eye(pack, dtype=w_col.dtype), w_col)


def _pack_rows(p, pack):
    if pack == 1:
        return p
    m, k = p.shape
    return p.reshape(m // pack, pack * k)


def _unpack_cols(y, pack, cols_per_group):
    if pack == 1:
        return y
    return y.reshape(y.shape[0] * pack, cols_per_group)


def _pad_cols(w_col):
    cols = w_col.shape[1]
    cp = _round_up(cols, LANE)
    if cp != cols:
        w_col = jnp.pad(w_col, ((0, 0), (0, cp - cols)))
    return w_col


def prepare_params(params):
    """One-time hoisted weight preprocessing: phase layout, block-diagonal
    packing for narrow layers, lane-dense column padding, bf16 cast."""
    w1 = params["w1"]                                        # (z_dim, C1, 4, 4)
    z_dim, c1 = w1.shape[0], w1.shape[1]
    # 1x1 input, stride 1, pad 0: output (oy, ox) == kernel tap (ky, kx).
    w1c = jnp.transpose(w1, (0, 2, 3, 1)).reshape(z_dim, 16 * c1)
    c2, c3 = params["w2"].shape[1], params["w3"].shape[1]
    w2c = _pack_weight(_phase_weight(params["w2"]), _pick_pack(4 * c2))
    w3c = _pack_weight(_phase_weight(params["w3"]), _pick_pack(4 * c3))
    w4c = _pack_weight(_phase_weight(params["w4"]), _pick_pack(4 * 3))
    return {
        "w1c": _pad_cols(w1c).astype(jnp.bfloat16),
        "w2c": _pad_cols(w2c).astype(jnp.bfloat16),
        "w3c": _pad_cols(w3c).astype(jnp.bfloat16),
        "w4c": _pad_cols(w4c).astype(jnp.bfloat16),
        "g1": params["g1"], "b1": params["b1"],
        "g2": params["g2"], "b2": params["b2"],
        "g3": params["g3"], "b3": params["b3"],
    }


def _convt_bn_relu_layer(x, w_col, gamma, beta):
    """One ConvTranspose2d(4,2,1,bias=False)+BN+ReLU layer (phase decomposed)."""
    c_out = gamma.shape[0]
    pack = _pick_pack(4 * c_out)
    p, (n_, h, w) = _phase_patches(x)
    p = _pack_rows(p, pack)
    out = gemm_bn_relu(p, w_col, gamma, beta, n_rep=4 * pack)
    out = _unpack_cols(out, pack, 4 * c_out)
    return _interleave_phases(out, n_, h, w, c_out)


@jax.jit
def cifar_gen_forward(z, prep):
    """Matches CifarGen.forward (training-mode BN).  z: (N, z_dim) or
    (N, z_dim, 1, 1).  Returns NCHW image (N, 3, 32, 32), float32."""
    if z.ndim == 4:
        z = z.reshape(z.shape[0], z.shape[1])
    n = z.shape[0]
    c1 = prep["g1"].shape[0]

    # Layer 1: ConvT(z_dim, 4*ngf, 4, 1, 0) on a 1x1 input == plain GEMM. 1x1 -> 4x4.
    out = gemm_bn_relu(z.astype(jnp.bfloat16), prep["w1c"], prep["g1"], prep["b1"],
                       n_rep=16)
    x = out.reshape(n, 4, 4, c1)

    # Layer 2: ConvT(4*ngf, 2*ngf, 4, 2, 1) + BN + ReLU: 4x4 -> 8x8.
    x = _convt_bn_relu_layer(x, prep["w2c"], prep["g2"], prep["b2"])

    # Layer 3: ConvT(2*ngf, ngf, 4, 2, 1) + BN + ReLU: 8x8 -> 16x16.
    x = _convt_bn_relu_layer(x, prep["w3c"], prep["g3"], prep["b3"])

    # Layer 4: ConvT(ngf, 3, 4, 2, 1) + Tanh: 16x16 -> 32x32.
    pack4 = _pick_pack(4 * 3)
    p, (n_, h, w) = _phase_patches(x)
    p = _pack_rows(p, pack4)
    out = gemm_tanh(p, prep["w4c"], cols=pack4 * 4 * 3)
    out = _unpack_cols(out, pack4, 4 * 3)
    x = _interleave_phases(out, n_, h, w, 3)

    return jnp.transpose(x, (0, 3, 1, 2)).astype(jnp.float32)   # NHWC -> NCHW


def init_params(key, z_dim, ngf):
    """Deterministic synthetic weights (DCGAN-style N(0, 0.02) init), PyTorch layouts."""
    ks = jax.random.split(key, 4)
    std = 0.02
    params = {
        # PyTorch ConvTranspose2d weight layout: (C_in, C_out, kH, kW), bias=False.
        "w1": std * jax.random.normal(ks[0], (z_dim, ngf * 4, 4, 4), jnp.float32),
        "w2": std * jax.random.normal(ks[1], (ngf * 4, ngf * 2, 4, 4), jnp.float32),
        "w3": std * jax.random.normal(ks[2], (ngf * 2, ngf, 4, 4), jnp.float32),
        "w4": std * jax.random.normal(ks[3], (ngf, 3, 4, 4), jnp.float32),
        "g1": jnp.ones((ngf * 4,), jnp.float32), "b1": jnp.zeros((ngf * 4,), jnp.float32),
        "g2": jnp.ones((ngf * 2,), jnp.float32), "b2": jnp.zeros((ngf * 2,), jnp.float32),
        "g3": jnp.ones((ngf,), jnp.float32),     "b3": jnp.zeros((ngf,), jnp.float32),
    }
    # TODO(synk): BatchNorm running-stat tracking / the `inference` flag have no
    # kernel equivalent here; forward uses training-mode batch statistics
    # (PyTorch's default forward behavior).
    return params


if __name__ == "__main__":
    batch, z_dim, ngf = 2, 16, 8
    key = jax.random.PRNGKey(0)
    pkey, zkey = jax.random.split(key)
    params = init_params(pkey, z_dim, ngf)
    prep = prepare_params(params)          # hoisted weight preprocessing (once)
    z = jax.random.normal(zkey, (batch, z_dim), jnp.float32)

    img = cifar_gen_forward(z, prep)
    img = jax.block_until_ready(img)

    assert img.shape == (batch, 3, 32, 32), img.shape
    assert img.dtype == jnp.float32
    assert bool(jnp.all(jnp.isfinite(img)))
    assert float(jnp.max(jnp.abs(img))) <= 1.0 + 1e-6  # tanh range
    print("KERNEL_OK")
</pallas_src>

<mosaic_0001>
module attributes {stable_mosaic.version = 11 : i64} {
  func.func @_gemm_stats_kernel(%arg0: i32, %arg1: memref<16x16xbf16, #tpu.memory_space<vmem>>, %arg2: memref<16x512xbf16, #tpu.memory_space<vmem>>, %arg3: memref<16x512xbf16, #tpu.memory_space<vmem>>, %arg4: memref<1x1x512xf32, #tpu.memory_space<vmem>>, %arg5: memref<1x1x512xf32, #tpu.memory_space<vmem>>) attributes {dimension_semantics = [#tpu.dimension_semantics<parallel>], iteration_bounds = array<i64: 1>, scalar_prefetch = 0 : i64, scratch_operands = 0 : i64, tpu.core_type = #tpu.core_type<tc>, window_params = [{transform_indices = @transform_0, window_bounds = array<i64: 16, 16>}, {pipeline_mode = #tpu.pipeline_mode<synchronous>, transform_indices = @transform_1, window_bounds = array<i64: 16, 512>}, {transform_indices = @transform_2, window_bounds = array<i64: 16, 512>}, {transform_indices = @transform_3, window_bounds = array<i64: 1, 1, 512>}, {transform_indices = @transform_4, window_bounds = array<i64: 1, 1, 512>}]} {
    %c0 = arith.constant 0 : index
    %c0_0 = arith.constant 0 : index
    %0 = vector.load %arg1[%c0, %c0_0] : memref<16x16xbf16, #tpu.memory_space<vmem>>, vector<16x16xbf16>
    %c0_1 = arith.constant 0 : index
    %c0_2 = arith.constant 0 : index
    %1 = vector.load %arg2[%c0_1, %c0_2] : memref<16x512xbf16, #tpu.memory_space<vmem>>, vector<16x512xbf16>
    %cst = arith.constant dense<0.000000e+00> : vector<16x512xf32>
    %2 = tpu.matmul %0, %1, %cst {dimension_numbers = #tpu.dot_dimension_numbers<[1], [0], [0], [1], [0, 0, 1, 1], [], []>} : vector<16x16xbf16>, vector<16x512xbf16>, vector<16x512xf32> -> vector<16x512xf32>
    %3 = arith.truncf %2 : vector<16x512xf32> to vector<16x512xbf16>
    %c0_3 = arith.constant 0 : index
    %c0_4 = arith.constant 0 : index
    %4 = vector.load %arg3[%c0_3, %c0_4] : memref<16x512xbf16, #tpu.memory_space<vmem>>, vector<16x512xbf16>
    tpu.vector_store %arg3[%c0_3, %c0_4], %3 {strides = array<i32>} : memref<16x512xbf16, #tpu.memory_space<vmem>>, vector<16x512xbf16>,
    %cst_5 = arith.constant dense<0.000000e+00> : vector<512xf32>
    %5 = vector.multi_reduction <add>, %2, %cst_5 [0] : vector<16x512xf32> to vector<512xf32>
    %6 = vector.shape_cast %5 : vector<512xf32> to vector<1x512xf32>
    %7 = arith.mulf %2, %2 : vector<16x512xf32>
    %cst_6 = arith.constant dense<0.000000e+00> : vector<512xf32>
    %8 = vector.multi_reduction <add>, %7, %cst_6 [0] : vector<16x512xf32> to vector<512xf32>
    %9 = vector.shape_cast %8 : vector<512xf32> to vector<1x512xf32>
    %10 = vector.shape_cast %6 : vector<1x512xf32> to vector<1x1x512xf32>
    %c0_7 = arith.constant 0 : index
    %c0_8 = arith.constant 0 : index
    %c0_9 = arith.constant 0 : index
    %11 = vector.load %arg4[%c0_7, %c0_8, %c0_9] : memref<1x1x512xf32, #tpu.memory_space<vmem>>, vector<1x1x512xf32>
    tpu.vector_store %arg4[%c0_7, %c0_8, %c0_9], %10 {strides = array<i32>} : memref<1x1x512xf32, #tpu.memory_space<vmem>>, vector<1x1x512xf32>,
    %12 = vector.shape_cast %9 : vector<1x512xf32> to vector<1x1x512xf32>
    %c0_10 = arith.constant 0 : index
    %c0_11 = arith.constant 0 : index
    %c0_12 = arith.constant 0 : index
    %13 = vector.load %arg5[%c0_10, %c0_11, %c0_12] : memref<1x1x512xf32, #tpu.memory_space<vmem>>, vector<1x1x512xf32>
    tpu.vector_store %arg5[%c0_10, %c0_11, %c0_12], %12 {strides = array<i32>} : memref<1x1x512xf32, #tpu.memory_space<vmem>>, vector<1x1x512xf32>,
    return
  }
  func.func @transform_0(%arg0: i32) -> (i32, i32) {
    %c0_i32 = arith.constant 0 : i32
    %c0_i32_0 = arith.constant 0 : i32
    return %arg0, %c0_i32 : i32, i32
  }
  func.func @transform_1(%arg0: i32) -> (i32, i32) {
    %c0_i32 = arith.constant 0 : i32
    %c0_i32_0 = arith.constant 0 : i32
    %c0_i32_1 = arith.constant 0 : i32
    return %c0_i32, %c0_i32_0 : i32, i32
  }
  func.func @transform_2(%arg0: i32) -> (i32, i32) {
    %c0_i32 = arith.constant 0 : i32
    %c0_i32_0 = arith.constant 0 : i32
    return %arg0, %c0_i32 : i32, i32
  }
  func.func @transform_3(%arg0: i32) -> (i32, i32, i32) {
    %c0_i32 = arith.constant 0 : i32
    %c0_i32_0 = arith.constant 0 : i32
    %c0_i32_1 = arith.constant 0 : i32
    return %arg0, %c0_i32, %c0_i32_0 : i32, i32, i32
  }
  func.func @transform_4(%arg0: i32) -> (i32, i32, i32) {
    %c0_i32 = arith.constant 0 : i32
    %c0_i32_0 = arith.constant 0 : i32
    %c0_i32_1 = arith.constant 0 : i32
    return %arg0, %c0_i32, %c0_i32_0 : i32, i32, i32
  }
}

module attributes {stable_mosaic.version = 11 : i64} {
  func.func @_affine_relu_kernel(%arg0: i32, %arg1: memref<16x512xbf16, #tpu.memory_space<vmem>>, %arg2: memref<1x512xf32, #tpu.memory_space<vmem>>, %arg3: memref<1x512xf32, #tpu.memory_space<vmem>>, %arg4: memref<16x512xbf16, #tpu.memory_space<vmem>>) attributes {dimension_semantics = [#tpu.dimension_semantics<parallel>], iteration_bounds = array<i64: 1>, scalar_prefetch = 0 : i64, scratch_operands = 0 : i64, tpu.core_type = #tpu.core_type<tc>, window_params = [{transform_indices = @transform_0, window_bounds = array<i64: 16, 512>}, {pipeline_mode = #tpu.pipeline_mode<synchronous>, transform_indices = @transform_1, window_bounds = array<i64: 1, 512>}, {pipeline_mode = #tpu.pipeline_mode<synchronous>, transform_indices = @transform_2, window_bounds = array<i64: 1, 512>}, {transform_indices = @transform_3, window_bounds = array<i64: 16, 512>}]} {
    %c0 = arith.constant 0 : index
    %c0_0 = arith.constant 0 : index
    %0 = vector.load %arg1[%c0, %c0_0] : memref<16x512xbf16, #tpu.memory_space<vmem>>, vector<16x512xbf16>
    %1 = arith.extf %0 : vector<16x512xbf16> to vector<16x512xf32>
    %c0_1 = arith.constant 0 : index
    %c0_2 = arith.constant 0 : index
    %2 = vector.load %arg2[%c0_1, %c0_2] : memref<1x512xf32, #tpu.memory_space<vmem>>, vector<1x512xf32>
    %3 = vector.broadcast %2 : vector<1x512xf32> to vector<16x512xf32>
    %4 = arith.mulf %1, %3 : vector<16x512xf32>
    %c0_3 = arith.constant 0 : index
    %c0_4 = arith.constant 0 : index
    %5 = vector.load %arg3[%c0_3, %c0_4] : memref<1x512xf32, #tpu.memory_space<vmem>>, vector<1x512xf32>
    %6 = vector.broadcast %5 : vector<1x512xf32> to vector<16x512xf32>
    %7 = arith.addf %4, %6 : vector<16x512xf32>
    %cst = arith.constant 0.000000e+00 : f32
    %8 = vector.broadcast %cst : f32 to vector<16x512xf32>
    %9 = arith.maximumf %7, %8 : vector<16x512xf32>
    %10 = arith.truncf %9 : vector<16x512xf32> to vector<16x512xbf16>
    %c0_5 = arith.constant 0 : index
    %c0_6 = arith.constant 0 : index
    %11 = vector.load %arg4[%c0_5, %c0_6] : memref<16x512xbf16, #tpu.memory_space<vmem>>, vector<16x512xbf16>
    tpu.vector_store %arg4[%c0_5, %c0_6], %10 {strides = array<i32>} : memref<16x512xbf16, #tpu.memory_space<vmem>>, vector<16x512xbf16>,
    return
  }
  func.func @transform_0(%arg0: i32) -> (i32, i32) {
    %c0_i32 = arith.constant 0 : i32
    %c0_i32_0 = arith.constant 0 : i32
    return %arg0, %c0_i32 : i32, i32
  }
  func.func @transform_1(%arg0: i32) -> (i32, i32) {
    %c0_i32 = arith.constant 0 : i32
    %c0_i32_0 = arith.constant 0 : i32
    %c0_i32_1 = arith.constant 0 : i32
    return %c0_i32, %c0_i32_0 : i32, i32
  }
  func.func @transform_2(%arg0: i32) -> (i32, i32) {
    %c0_i32 = arith.constant 0 : i32
    %c0_i32_0 = arith.constant 0 : i32
    %c0_i32_1 = arith.constant 0 : i32
    return %c0_i32, %c0_i32_0 : i32, i32
  }
  func.func @transform_3(%arg0: i32) -> (i32, i32) {
    %c0_i32 = arith.constant 0 : i32
    %c0_i32_0 = arith.constant 0 : i32
    return %arg0, %c0_i32 : i32, i32
  }
}

module attributes {stable_mosaic.version = 11 : i64} {
  func.func @_gemm_stats_kernel(%arg0: i32, %arg1: memref<16x576xbf16, #tpu.memory_space<vmem>>, %arg2: memref<576x128xbf16, #tpu.memory_space<vmem>>, %arg3: memref<16x128xbf16, #tpu.memory_space<vmem>>, %arg4: memref<1x1x128xf32, #tpu.memory_space<vmem>>, %arg5: memref<1x1x128xf32, #tpu.memory_space<vmem>>) attributes {dimension_semantics = [#tpu.dimension_semantics<parallel>], iteration_bounds = array<i64: 1>, scalar_prefetch = 0 : i64, scratch_operands = 0 : i64, tpu.core_type = #tpu.core_type<tc>, window_params = [{transform_indices = @transform_0, window_bounds = array<i64: 16, 576>}, {pipeline_mode = #tpu.pipeline_mode<synchronous>, transform_indices = @transform_1, window_bounds = array<i64: 576, 128>}, {transform_indices = @transform_2, window_bounds = array<i64: 16, 128>}, {transform_indices = @transform_3, window_bounds = array<i64: 1, 1, 128>}, {transform_indices = @transform_4, window_bounds = array<i64: 1, 1, 128>}]} {
    %c0 = arith.constant 0 : index
    %c0_0 = arith.constant 0 : index
    %0 = vector.load %arg1[%c0, %c0_0] : memref<16x576xbf16, #tpu.memory_space<vmem>>, vector<16x576xbf16>
    %c0_1 = arith.constant 0 : index
    %c0_2 = arith.constant 0 : index
    %1 = vector.load %arg2[%c0_1, %c0_2] : memref<576x128xbf16, #tpu.memory_space<vmem>>, vector<576x128xbf16>
    %cst = arith.constant dense<0.000000e+00> : vector<16x128xf32>
    %2 = tpu.matmul %0, %1, %cst {dimension_numbers = #tpu.dot_dimension_numbers<[1], [0], [0], [1], [0, 0, 1, 1], [], []>} : vector<16x576xbf16>, vector<576x128xbf16>, vector<16x128xf32> -> vector<16x128xf32>
    %3 = arith.truncf %2 : vector<16x128xf32> to vector<16x128xbf16>
    %c0_3 = arith.constant 0 : index
    %c0_4 = arith.constant 0 : index
    %4 = vector.load %arg3[%c0_3, %c0_4] : memref<16x128xbf16, #tpu.memory_space<vmem>>, vector<16x128xbf16>
    tpu.vector_store %arg3[%c0_3, %c0_4], %3 {strides = array<i32>} : memref<16x128xbf16, #tpu.memory_space<vmem>>, vector<16x128xbf16>,
    %cst_5 = arith.constant dense<0.000000e+00> : vector<128xf32>
    %5 = vector.multi_reduction <add>, %2, %cst_5 [0] : vector<16x128xf32> to vector<128xf32>
    %6 = vector.shape_cast %5 : vector<128xf32> to vector<1x128xf32>
    %7 = arith.mulf %2, %2 : vector<16x128xf32>
    %cst_6 = arith.constant dense<0.000000e+00> : vector<128xf32>
    %8 = vector.multi_reduction <add>, %7, %cst_6 [0] : vector<16x128xf32> to vector<128xf32>
    %9 = vector.shape_cast %8 : vector<128xf32> to vector<1x128xf32>
    %10 = vector.shape_cast %6 : vector<1x128xf32> to vector<1x1x128xf32>
    %c0_7 = arith.constant 0 : index
    %c0_8 = arith.constant 0 : index
    %c0_9 = arith.constant 0 : index
    %11 = vector.load %arg4[%c0_7, %c0_8, %c0_9] : memref<1x1x128xf32, #tpu.memory_space<vmem>>, vector<1x1x128xf32>
    tpu.vector_store %arg4[%c0_7, %c0_8, %c0_9], %10 {strides = array<i32>} : memref<1x1x128xf32, #tpu.memory_space<vmem>>, vector<1x1x128xf32>,
    %12 = vector.shape_cast %9 : vector<1x128xf32> to vector<1x1x128xf32>
    %c0_10 = arith.constant 0 : index
    %c0_11 = arith.constant 0 : index
    %c0_12 = arith.constant 0 : index
    %13 = vector.load %arg5[%c0_10, %c0_11, %c0_12] : memref<1x1x128xf32, #tpu.memory_space<vmem>>, vector<1x1x128xf32>
    tpu.vector_store %arg5[%c0_10, %c0_11, %c0_12], %12 {strides = array<i32>} : memref<1x1x128xf32, #tpu.memory_space<vmem>>, vector<1x1x128xf32>,
    return
  }
  func.func @transform_0(%arg0: i32) -> (i32, i32) {
    %c0_i32 = arith.constant 0 : i32
    %c0_i32_0 = arith.constant 0 : i32
    return %arg0, %c0_i32 : i32, i32
  }
  func.func @transform_1(%arg0: i32) -> (i32, i32) {
    %c0_i32 = arith.constant 0 : i32
    %c0_i32_0 = arith.constant 0 : i32
    %c0_i32_1 = arith.constant 0 : i32
    return %c0_i32, %c0_i32_0 : i32, i32
  }
  func.func @transform_2(%arg0: i32) -> (i32, i32) {
    %c0_i32 = arith.constant 0 : i32
    %c0_i32_0 = arith.constant 0 : i32
    return %arg0, %c0_i32 : i32, i32
  }
  func.func @transform_3(%arg0: i32) -> (i32, i32, i32) {
    %c0_i32 = arith.constant 0 : i32
    %c0_i32_0 = arith.constant 0 : i32
    %c0_i32_1 = arith.constant 0 : i32
    return %arg0, %c0_i32, %c0_i32_0 : i32, i32, i32
  }
  func.func @transform_4(%arg0: i32) -> (i32, i32, i32) {
    %c0_i32 = arith.constant 0 : i32
    %c0_i32_0 = arith.constant 0 : i32
    %c0_i32_1 = arith.constant 0 : i32
    return %arg0, %c0_i32, %c0_i32_0 : i32, i32, i32
  }
}

module attributes {stable_mosaic.version = 11 : i64} {
  func.func @_affine_relu_kernel(%arg0: i32, %arg1: memref<16x128xbf16, #tpu.memory_space<vmem>>, %arg2: memref<1x128xf32, #tpu.memory_space<vmem>>, %arg3: memref<1x128xf32, #tpu.memory_space<vmem>>, %arg4: memref<16x128xbf16, #tpu.memory_space<vmem>>) attributes {dimension_semantics = [#tpu.dimension_semantics<parallel>], iteration_bounds = array<i64: 1>, scalar_prefetch = 0 : i64, scratch_operands = 0 : i64, tpu.core_type = #tpu.core_type<tc>, window_params = [{transform_indices = @transform_0, window_bounds = array<i64: 16, 128>}, {pipeline_mode = #tpu.pipeline_mode<synchronous>, transform_indices = @transform_1, window_bounds = array<i64: 1, 128>}, {pipeline_mode = #tpu.pipeline_mode<synchronous>, transform_indices = @transform_2, window_bounds = array<i64: 1, 128>}, {transform_indices = @transform_3, window_bounds = array<i64: 16, 128>}]} {
    %c0 = arith.constant 0 : index
    %c0_0 = arith.constant 0 : index
    %0 = vector.load %arg1[%c0, %c0_0] : memref<16x128xbf16, #tpu.memory_space<vmem>>, vector<16x128xbf16>
    %1 = arith.extf %0 : vector<16x128xbf16> to vector<16x128xf32>
    %c0_1 = arith.constant 0 : index
    %c0_2 = arith.constant 0 : index
    %2 = vector.load %arg2[%c0_1, %c0_2] : memref<1x128xf32, #tpu.memory_space<vmem>>, vector<1x128xf32>
    %3 = vector.broadcast %2 : vector<1x128xf32> to vector<16x128xf32>
    %4 = arith.mulf %1, %3 : vector<16x128xf32>
    %c0_3 = arith.constant 0 : index
    %c0_4 = arith.constant 0 : index
    %5 = vector.load %arg3[%c0_3, %c0_4] : memref<1x128xf32, #tpu.memory_space<vmem>>, vector<1x128xf32>
    %6 = vector.broadcast %5 : vector<1x128xf32> to vector<16x128xf32>
    %7 = arith.addf %4, %6 : vector<16x128xf32>
    %cst = arith.constant 0.000000e+00 : f32
    %8 = vector.broadcast %cst : f32 to vector<16x128xf32>
    %9 = arith.maximumf %7, %8 : vector<16x128xf32>
    %10 = arith.truncf %9 : vector<16x128xf32> to vector<16x128xbf16>
    %c0_5 = arith.constant 0 : index
    %c0_6 = arith.constant 0 : index
    %11 = vector.load %arg4[%c0_5, %c0_6] : memref<16x128xbf16, #tpu.memory_space<vmem>>, vector<16x128xbf16>
    tpu.vector_store %arg4[%c0_5, %c0_6], %10 {strides = array<i32>} : memref<16x128xbf16, #tpu.memory_space<vmem>>, vector<16x128xbf16>,
    return
  }
  func.func @transform_0(%arg0: i32) -> (i32, i32) {
    %c0_i32 = arith.constant 0 : i32
    %c0_i32_0 = arith.constant 0 : i32
    return %arg0, %c0_i32 : i32, i32
  }
  func.func @transform_1(%arg0: i32) -> (i32, i32) {
    %c0_i32 = arith.constant 0 : i32
    %c0_i32_0 = arith.constant 0 : i32
    %c0_i32_1 = arith.constant 0 : i32
    return %c0_i32, %c0_i32_0 : i32, i32
  }
  func.func @transform_2(%arg0: i32) -> (i32, i32) {
    %c0_i32 = arith.constant 0 : i32
    %c0_i32_0 = arith.constant 0 : i32
    %c0_i32_1 = arith.constant 0 : i32
    return %c0_i32, %c0_i32_0 : i32, i32
  }
  func.func @transform_3(%arg0: i32) -> (i32, i32) {
    %c0_i32 = arith.constant 0 : i32
    %c0_i32_0 = arith.constant 0 : i32
    return %arg0, %c0_i32 : i32, i32
  }
}

module attributes {stable_mosaic.version = 11 : i64} {
  func.func @_gemm_stats_kernel(%arg0: i32, %arg1: memref<32x576xbf16, #tpu.memory_space<vmem>>, %arg2: memref<576x128xbf16, #tpu.memory_space<vmem>>, %arg3: memref<32x128xbf16, #tpu.memory_space<vmem>>, %arg4: memref<1x1x128xf32, #tpu.memory_space<vmem>>, %arg5: memref<1x1x128xf32, #tpu.memory_space<vmem>>) attributes {dimension_semantics = [#tpu.dimension_semantics<parallel>], iteration_bounds = array<i64: 1>, scalar_prefetch = 0 : i64, scratch_operands = 0 : i64, tpu.core_type = #tpu.core_type<tc>, window_params = [{transform_indices = @transform_0, window_bounds = array<i64: 32, 576>}, {pipeline_mode = #tpu.pipeline_mode<synchronous>, transform_indices = @transform_1, window_bounds = array<i64: 576, 128>}, {transform_indices = @transform_2, window_bounds = array<i64: 32, 128>}, {transform_indices = @transform_3, window_bounds = array<i64: 1, 1, 128>}, {transform_indices = @transform_4, window_bounds = array<i64: 1, 1, 128>}]} {
    %c0 = arith.constant 0 : index
    %c0_0 = arith.constant 0 : index
    %0 = vector.load %arg1[%c0, %c0_0] : memref<32x576xbf16, #tpu.memory_space<vmem>>, vector<32x576xbf16>
    %c0_1 = arith.constant 0 : index
    %c0_2 = arith.constant 0 : index
    %1 = vector.load %arg2[%c0_1, %c0_2] : memref<576x128xbf16, #tpu.memory_space<vmem>>, vector<576x128xbf16>
    %cst = arith.constant dense<0.000000e+00> : vector<32x128xf32>
    %2 = tpu.matmul %0, %1, %cst {dimension_numbers = #tpu.dot_dimension_numbers<[1], [0], [0], [1], [0, 0, 1, 1], [], []>} : vector<32x576xbf16>, vector<576x128xbf16>, vector<32x128xf32> -> vector<32x128xf32>
    %3 = arith.truncf %2 : vector<32x128xf32> to vector<32x128xbf16>
    %c0_3 = arith.constant 0 : index
    %c0_4 = arith.constant 0 : index
    %4 = vector.load %arg3[%c0_3, %c0_4] : memref<32x128xbf16, #tpu.memory_space<vmem>>, vector<32x128xbf16>
    tpu.vector_store %arg3[%c0_3, %c0_4], %3 {strides = array<i32>} : memref<32x128xbf16, #tpu.memory_space<vmem>>, vector<32x128xbf16>,
    %cst_5 = arith.constant dense<0.000000e+00> : vector<128xf32>
    %5 = vector.multi_reduction <add>, %2, %cst_5 [0] : vector<32x128xf32> to vector<128xf32>
    %6 = vector.shape_cast %5 : vector<128xf32> to vector<1x128xf32>
    %7 = arith.mulf %2, %2 : vector<32x128xf32>
    %cst_6 = arith.constant dense<0.000000e+00> : vector<128xf32>
    %8 = vector.multi_reduction <add>, %7, %cst_6 [0] : vector<32x128xf32> to vector<128xf32>
    %9 = vector.shape_cast %8 : vector<128xf32> to vector<1x128xf32>
    %10 = vector.shape_cast %6 : vector<1x128xf32> to vector<1x1x128xf32>
    %c0_7 = arith.constant 0 : index
    %c0_8 = arith.constant 0 : index
    %c0_9 = arith.constant 0 : index
    %11 = vector.load %arg4[%c0_7, %c0_8, %c0_9] : memref<1x1x128xf32, #tpu.memory_space<vmem>>, vector<1x1x128xf32>
    tpu.vector_store %arg4[%c0_7, %c0_8, %c0_9], %10 {strides = array<i32>} : memref<1x1x128xf32, #tpu.memory_space<vmem>>, vector<1x1x128xf32>,
    %12 = vector.shape_cast %9 : vector<1x128xf32> to vector<1x1x128xf32>
    %c0_10 = arith.constant 0 : index
    %c0_11 = arith.constant 0 : index
    %c0_12 = arith.constant 0 : index
    %13 = vector.load %arg5[%c0_10, %c0_11, %c0_12] : memref<1x1x128xf32, #tpu.memory_space<vmem>>, vector<1x1x128xf32>
    tpu.vector_store %arg5[%c0_10, %c0_11, %c0_12], %12 {strides = array<i32>} : memref<1x1x128xf32, #tpu.memory_space<vmem>>, vector<1x1x128xf32>,
    return
  }
  func.func @transform_0(%arg0: i32) -> (i32, i32) {
    %c0_i32 = arith.constant 0 : i32
    %c0_i32_0 = arith.constant 0 : i32
    return %arg0, %c0_i32 : i32, i32
  }
  func.func @transform_1(%arg0: i32) -> (i32, i32) {
    %c0_i32 = arith.constant 0 : i32
    %c0_i32_0 = arith.constant 0 : i32
    %c0_i32_1 = arith.constant 0 : i32
    return %c0_i32, %c0_i32_0 : i32, i32
  }
  func.func @transform_2(%arg0: i32) -> (i32, i32) {
    %c0_i32 = arith.constant 0 : i32
    %c0_i32_0 = arith.constant 0 : i32
    return %arg0, %c0_i32 : i32, i32
  }
  func.func @transform_3(%arg0: i32) -> (i32, i32, i32) {
    %c0_i32 = arith.constant 0 : i32
    %c0_i32_0 = arith.constant 0 : i32
    %c0_i32_1 = arith.constant 0 : i32
    return %arg0, %c0_i32, %c0_i32_0 : i32, i32, i32
  }
  func.func @transform_4(%arg0: i32) -> (i32, i32, i32) {
    %c0_i32 = arith.constant 0 : i32
    %c0_i32_0 = arith.constant 0 : i32
    %c0_i32_1 = arith.constant 0 : i32
    return %arg0, %c0_i32, %c0_i32_0 : i32, i32, i32
  }
}

module attributes {stable_mosaic.version = 11 : i64} {
  func.func @_affine_relu_kernel(%arg0: i32, %arg1: memref<32x128xbf16, #tpu.memory_space<vmem>>, %arg2: memref<1x128xf32, #tpu.memory_space<vmem>>, %arg3: memref<1x128xf32, #tpu.memory_space<vmem>>, %arg4: memref<32x128xbf16, #tpu.memory_space<vmem>>) attributes {dimension_semantics = [#tpu.dimension_semantics<parallel>], iteration_bounds = array<i64: 1>, scalar_prefetch = 0 : i64, scratch_operands = 0 : i64, tpu.core_type = #tpu.core_type<tc>, window_params = [{transform_indices = @transform_0, window_bounds = array<i64: 32, 128>}, {pipeline_mode = #tpu.pipeline_mode<synchronous>, transform_indices = @transform_1, window_bounds = array<i64: 1, 128>}, {pipeline_mode = #tpu.pipeline_mode<synchronous>, transform_indices = @transform_2, window_bounds = array<i64: 1, 128>}, {transform_indices = @transform_3, window_bounds = array<i64: 32, 128>}]} {
    %c0 = arith.constant 0 : index
    %c0_0 = arith.constant 0 : index
    %0 = vector.load %arg1[%c0, %c0_0] : memref<32x128xbf16, #tpu.memory_space<vmem>>, vector<32x128xbf16>
    %1 = arith.extf %0 : vector<32x128xbf16> to vector<32x128xf32>
    %c0_1 = arith.constant 0 : index
    %c0_2 = arith.constant 0 : index
    %2 = vector.load %arg2[%c0_1, %c0_2] : memref<1x128xf32, #tpu.memory_space<vmem>>, vector<1x128xf32>
    %3 = vector.broadcast %2 : vector<1x128xf32> to vector<32x128xf32>
    %4 = arith.mulf %1, %3 : vector<32x128xf32>
    %c0_3 = arith.constant 0 : index
    %c0_4 = arith.constant 0 : index
    %5 = vector.load %arg3[%c0_3, %c0_4] : memref<1x128xf32, #tpu.memory_space<vmem>>, vector<1x128xf32>
    %6 = vector.broadcast %5 : vector<1x128xf32> to vector<32x128xf32>
    %7 = arith.addf %4, %6 : vector<32x128xf32>
    %cst = arith.constant 0.000000e+00 : f32
    %8 = vector.broadcast %cst : f32 to vector<32x128xf32>
    %9 = arith.maximumf %7, %8 : vector<32x128xf32>
    %10 = arith.truncf %9 : vector<32x128xf32> to vector<32x128xbf16>
    %c0_5 = arith.constant 0 : index
    %c0_6 = arith.constant 0 : index
    %11 = vector.load %arg4[%c0_5, %c0_6] : memref<32x128xbf16, #tpu.memory_space<vmem>>, vector<32x128xbf16>
    tpu.vector_store %arg4[%c0_5, %c0_6], %10 {strides = array<i32>} : memref<32x128xbf16, #tpu.memory_space<vmem>>, vector<32x128xbf16>,
    return
  }
  func.func @transform_0(%arg0: i32) -> (i32, i32) {
    %c0_i32 = arith.constant 0 : i32
    %c0_i32_0 = arith.constant 0 : i32
    return %arg0, %c0_i32 : i32, i32
  }
  func.func @transform_1(%arg0: i32) -> (i32, i32) {
    %c0_i32 = arith.constant 0 : i32
    %c0_i32_0 = arith.constant 0 : i32
    %c0_i32_1 = arith.constant 0 : i32
    return %c0_i32, %c0_i32_0 : i32, i32
  }
  func.func @transform_2(%arg0: i32) -> (i32, i32) {
    %c0_i32 = arith.constant 0 : i32
    %c0_i32_0 = arith.constant 0 : i32
    %c0_i32_1 = arith.constant 0 : i32
    return %c0_i32, %c0_i32_0 : i32, i32
  }
  func.func @transform_3(%arg0: i32) -> (i32, i32) {
    %c0_i32 = arith.constant 0 : i32
    %c0_i32_0 = arith.constant 0 : i32
    return %arg0, %c0_i32 : i32, i32
  }
}

module attributes {stable_mosaic.version = 11 : i64} {
  func.func @_gemm_tanh_kernel(%arg0: i32, %arg1: memref<64x576xbf16, #tpu.memory_space<vmem>>, %arg2: memref<576x128xbf16, #tpu.memory_space<vmem>>, %arg3: memref<64x128xbf16, #tpu.memory_space<vmem>>) attributes {dimension_semantics = [#tpu.dimension_semantics<parallel>], iteration_bounds = array<i64: 1>, scalar_prefetch = 0 : i64, scratch_operands = 0 : i64, tpu.core_type = #tpu.core_type<tc>, window_params = [{transform_indices = @transform_0, window_bounds = array<i64: 64, 576>}, {pipeline_mode = #tpu.pipeline_mode<synchronous>, transform_indices = @transform_1, window_bounds = array<i64: 576, 128>}, {transform_indices = @transform_2, window_bounds = array<i64: 64, 128>}]} {
    %c0 = arith.constant 0 : index
    %c0_0 = arith.constant 0 : index
    %0 = vector.load %arg1[%c0, %c0_0] : memref<64x576xbf16, #tpu.memory_space<vmem>>, vector<64x576xbf16>
    %c0_1 = arith.constant 0 : index
    %c0_2 = arith.constant 0 : index
    %1 = vector.load %arg2[%c0_1, %c0_2] : memref<576x128xbf16, #tpu.memory_space<vmem>>, vector<576x128xbf16>
    %cst = arith.constant dense<0.000000e+00> : vector<64x128xf32>
    %2 = tpu.matmul %0, %1, %cst {dimension_numbers = #tpu.dot_dimension_numbers<[1], [0], [0], [1], [0, 0, 1, 1], [], []>} : vector<64x576xbf16>, vector<576x128xbf16>, vector<64x128xf32> -> vector<64x128xf32>
    %3 = math.tanh %2 : vector<64x128xf32>
    %4 = arith.truncf %3 : vector<64x128xf32> to vector<64x128xbf16>
    %c0_3 = arith.constant 0 : index
    %c0_4 = arith.constant 0 : index
    %5 = vector.load %arg3[%c0_3, %c0_4] : memref<64x128xbf16, #tpu.memory_space<vmem>>, vector<64x128xbf16>
    tpu.vector_store %arg3[%c0_3, %c0_4], %4 {strides = array<i32>} : memref<64x128xbf16, #tpu.memory_space<vmem>>, vector<64x128xbf16>,
    return
  }
  func.func @transform_0(%arg0: i32) -> (i32, i32) {
    %c0_i32 = arith.constant 0 : i32
    %c0_i32_0 = arith.constant 0 : i32
    return %arg0, %c0_i32 : i32, i32
  }
  func.func @transform_1(%arg0: i32) -> (i32, i32) {
    %c0_i32 = arith.constant 0 : i32
    %c0_i32_0 = arith.constant 0 : i32
    %c0_i32_1 = arith.constant 0 : i32
    return %c0_i32, %c0_i32_0 : i32, i32
  }
  func.func @transform_2(%arg0: i32) -> (i32, i32) {
    %c0_i32 = arith.constant 0 : i32
    %c0_i32_0 = arith.constant 0 : i32
    return %arg0, %c0_i32 : i32, i32
  }
}

</mosaic_0001>

<llo_original>
// kernel: tile.38
$region0: #{tile.38}
  #allocation0 [shape = 's32[1]{0}', space=sflag, size = 0x4, scoped, tag = 'scoped memory for tile.38']
  %s0 = inlined_call_operand.vmem [shape: f32[32], index: 0, kind: input, shape index: {}]
  %s1 = inlined_call_operand.vmem [shape: f32[16,32], index: 1, kind: output, shape index: {}]
  // Predicated region
  $region2: #{tile.38} parent=0 // pred_check
    _
  $region3: #{tile.38} parent=0 // pred_check_branch
    %3 = sbr.rel (0) target = $region5
  $region4: #{tile.38} parent=0 // pred_region
    _
  $region5: #{tile.38} parent=0 // pred_fallthru
    _
  %v4 = vld [vmem:[%s0] ss:$0 sm:$0xff]
  %5 = vst [vmem:[%s1] sm:$0xff] %v4
  %s6 = scalar_lea.vmem %s1, 8
  %7 = vst [vmem:[%s6] sm:$0xff] %v4

// kernel: cifar_gen_forward.8
$region0: #{cifar_gen_forward.8}
  #allocation0 [shape = 'u32[]', space=smem, size = 0x4, offset = 0x4, fixed_abs, tag = 'smem constant byte address 0x4 - core index']
  #allocation1 [shape = 'u32[144,128]{1,0:T(1,128)}', space=vmem, size = 0x12000, scoped, tag = 'internal scratch']
  %s0 = inlined_call_operand.vmem [shape: bf16[16,512], index: 0, kind: input, shape index: {}]
  %s1 = inlined_call_operand.vmem [shape: f32[1,512], index: 1, kind: input, shape index: {}]
  %s2 = inlined_call_operand.vmem [shape: f32[1,512], index: 2, kind: input, shape index: {}]
  %s3 = inlined_call_operand.vmem [shape: bf16[16,512], index: 3, kind: output, shape index: {}]
  %s4 = sld [smem:[#allocation0]]
  $region22: #{cifar_gen_forward.8} parent=0
    _
  %s6 = ssub.s32 1, %s4
  %s7 = scalar_select 0, %s6, %s4
  // Predicated region
  $region2: #{cifar_gen_forward.8} parent=0 // pred_check
    _
  $region3: #{cifar_gen_forward.8} parent=0 // pred_check_branch
    %9 = sbr.rel (0) target = $region5
  $region4: #{cifar_gen_forward.8} parent=0 // pred_region
    _
  $region5: #{cifar_gen_forward.8} parent=0 // pred_fallthru
    _
  // Predicated region
  $region6: #{cifar_gen_forward.8} parent=0 // pred_check
    _
  $region7: #{cifar_gen_forward.8} parent=0 // pred_check_branch
    %11 = sbr.rel (0) target = $region9
  $region8: #{cifar_gen_forward.8} parent=0 // pred_region
    _
  $region9: #{cifar_gen_forward.8} parent=0 // pred_fallthru
    _
  // Predicated region
  $region10: #{cifar_gen_forward.8} parent=0 // pred_check
    _
  $region11: #{cifar_gen_forward.8} parent=0 // pred_check_branch
    %13 = sbr.rel (0) target = $region13
  $region12: #{cifar_gen_forward.8} parent=0 // pred_region
    _
  $region13: #{cifar_gen_forward.8} parent=0 // pred_fallthru
    _
  %v14 = vld [vmem:[%s0] sm:$0xff]
  %v15 = vld [vmem:[%s0 + $0x8] sm:$0xff]
  %v16 = vld [vmem:[%s0 + $0x10] sm:$0xff]
  %v17 = vld [vmem:[%s0 + $0x18] sm:$0xff]
  %v18 = vunpack.c.l.bf16 %v14
  %v19 = vunpack.c.h.bf16 %v14
  %v20 = vunpack.c.l.bf16 %v15
  %v21 = vunpack.c.h.bf16 %v15
  %v22 = vunpack.c.l.bf16 %v16
  %v23 = vunpack.c.h.bf16 %v16
  %v24 = vunpack.c.l.bf16 %v17
  %v25 = vunpack.c.h.bf16 %v17
  %v26 = vld [vmem:[%s1] sm:$0xf]
  %v28 = vlaneseq
  %v29 = vshrl.u32 %v28, 7
  %v30 = vsub.s32 0, %v29
  %v31 = vrot.slane %v26, %v30
  %v32 = vlaneseq
  %v33 = vshrl.u32 %v32, 7
  %v34 = vsub.s32 1, %v33
  %v35 = vrot.slane %v26, %v34
  %v36 = vlaneseq
  %v37 = vshrl.u32 %v36, 7
  %v38 = vsub.s32 2, %v37
  %v39 = vrot.slane %v26, %v38
  %v40 = vlaneseq
  %v41 = vshrl.u32 %v40, 7
  %v42 = vsub.s32 3, %v41
  %v43 = vrot.slane %v26, %v42
  %v48 = vmul.f32 %v18, %v31
  %v49 = vmul.f32 %v19, %v35
  %v50 = vmul.f32 %v20, %v39
  %v51 = vmul.f32 %v21, %v43
  %v52 = vmul.f32 %v22, %v31
  %v53 = vmul.f32 %v23, %v35
  %v54 = vmul.f32 %v24, %v39
  %v55 = vmul.f32 %v25, %v43
  %v56 = vld [vmem:[%s2] sm:$0xf]
  %v58 = vlaneseq
  %v59 = vshrl.u32 %v58, 7
  %v60 = vsub.s32 0, %v59
  %v61 = vrot.slane %v56, %v60
  %v62 = vlaneseq
  %v63 = vshrl.u32 %v62, 7
  %v64 = vsub.s32 1, %v63
  %v65 = vrot.slane %v56, %v64
  %v66 = vlaneseq
  %v67 = vshrl.u32 %v66, 7
  %v68 = vsub.s32 2, %v67
  %v69 = vrot.slane %v56, %v68
  %v70 = vlaneseq
  %v71 = vshrl.u32 %v70, 7
  %v72 = vsub.s32 3, %v71
  %v73 = vrot.slane %v56, %v72
  %v78 = vadd.f32 %v48, %v61
  %v79 = vadd.f32 %v49, %v65
  %v80 = vadd.f32 %v50, %v69
  %v81 = vadd.f32 %v51, %v73
  %v82 = vadd.f32 %v52, %v61
  %v83 = vadd.f32 %v53, %v65
  %v84 = vadd.f32 %v54, %v69
  %v85 = vadd.f32 %v55, %v73
  %v86 = vmax.f32 %v78, 0.0
  %v87 = vmax.f32 %v79, 0.0
  %v88 = vmax.f32 %v80, 0.0
  %v89 = vmax.f32 %v81, 0.0
  %v90 = vmax.f32 %v82, 0.0
  %v91 = vmax.f32 %v83, 0.0
  %v92 = vmax.f32 %v84, 0.0
  %v93 = vmax.f32 %v85, 0.0
  %v94 = vpack.c.bf16 %v90, %v86
  %v95 = vpack.c.bf16 %v91, %v87
  %v96 = vpack.c.bf16 %v92, %v88
  %v97 = vpack.c.bf16 %v93, %v89
  %v102 = vunpack.c.l.b16 %v94
  %v103 = vunpack.c.l.b16 %v95
  %v104 = vunpack.c.l.b16 %v96
  %v105 = vunpack.c.l.b16 %v97
  %v106 = vunpack.c.h.b16 %v94
  %v107 = vunpack.c.h.b16 %v95
  %v108 = vunpack.c.h.b16 %v96
  %v109 = vunpack.c.h.b16 %v97
  %v110 = vpack.c.b16 %v103, %v102
  %v111 = vpack.c.b16 %v105, %v104
  %v112 = vpack.c.b16 %v107, %v106
  %v113 = vpack.c.b16 %v109, %v108
  %118 = vst [vmem:[%s3] sm:$0xff] %v110
  %119 = vst [vmem:[%s3 + $0x8] sm:$0xff] %v111
  %120 = vst [vmem:[%s3 + $0x10] sm:$0xff] %v112
  %121 = vst [vmem:[%s3 + $0x18] sm:$0xff] %v113
  // Predicated region
  $region14: #{cifar_gen_forward.8} parent=0 // pred_check
    _
  $region15: #{cifar_gen_forward.8} parent=0 // pred_check_branch
    %123 = sbr.rel (0) target = $region17
  $region16: #{cifar_gen_forward.8} parent=0 // pred_region
    _
  $region17: #{cifar_gen_forward.8} parent=0 // pred_fallthru
    _
  // Predicated region
  $region18: #{cifar_gen_forward.8} parent=0 // pred_check
    _
  $region19: #{cifar_gen_forward.8} parent=0 // pred_check_branch
    %125 = sbr.rel (0) target = $region21
  $region20: #{cifar_gen_forward.8} parent=0 // pred_region
    _
  $region21: #{cifar_gen_forward.8} parent=0 // pred_fallthru
    _

// kernel: cifar_gen_forward.7
$region0: #{cifar_gen_forward.7}
  #allocation0 [shape = 'u32[]', space=smem, size = 0x4, offset = 0x4, fixed_abs, tag = 'smem constant byte address 0x4 - core index']
  #allocation1 [shape = 'u32[144,128]{1,0:T(1,128)}', space=vmem, size = 0x12000, scoped, tag = 'internal scratch']
  %s0 = inlined_call_operand.vmem [shape: bf16[16,16], index: 0, kind: input, shape index: {}]
  %s1 = inlined_call_operand.hbm [shape: bf16[16,512], index: 1, kind: input, shape index: {}]
  %s2 = inlined_call_operand.vmem [shape: bf16[16,512], index: 2, kind: output, shape index: {0}]
  %s3 = inlined_call_operand.vmem [shape: f32[1,1,512], index: 3, kind: output, shape index: {1}]
  %s4 = inlined_call_operand.vmem [shape: f32[1,1,512], index: 4, kind: output, shape index: {2}]
  %5 = xla_tuple %s2, %s3, %s4
  %s6 = sld [smem:[#allocation0]]
  $region38: #{cifar_gen_forward.7} parent=0
    _
  %s8 = ssub.s32 1, %s6
  %s9 = scalar_select 0, %s8, %s6
  $region1: #{cifar_gen_forward.7} parent=0
    #allocation2 [shape = 'u8[16384]{0}', space=vmem, size = 0x4000, scoped, tag = 'input window, operand 1, single buffered']
    #allocation3 [shape = 's32[1]{0}', space=sflag, size = 0x4, scoped, tag = 'scoped memory for cifar_gen_forward.7']
    %10 = vsyncpa [#allocation3], 0
    // Predicated region
    $region2: #{cifar_gen_forward.7} parent=1 // pred_check
      _
    $region3: #{cifar_gen_forward.7} parent=1 // pred_check_branch
      %12 = sbr.rel (0) target = $region5
    $region4: #{cifar_gen_forward.7} parent=1 // pred_region
      _
    $region5: #{cifar_gen_forward.7} parent=1 // pred_fallthru
      _
    // Predicated region
    $region6: #{cifar_gen_forward.7} parent=1 // pred_check
      _
    $region7: #{cifar_gen_forward.7} parent=1 // pred_check_branch
      %14 = sbr.rel (0) target = $region9
    $region8: #{cifar_gen_forward.7} parent=1 // pred_region
      %s16 = ssub.s32 512, 512
      %17 = vsyncadd [#allocation3], %s16
      %s18 = sshll.u32 [#allocation2], 4
      %s19 = int_to_ptr.vmem [resolvable:$true] %s18
      %24 = dma.hbm_to_vmem [thread:$0]  %s1, 512, %s19, [#allocation3], 256, 256, 16
    $region9: #{cifar_gen_forward.7} parent=1 // pred_fallthru
      _
    // Predicated region
    $region10: #{cifar_gen_forward.7} parent=1 // pred_check
      _
    $region11: #{cifar_gen_forward.7} parent=1 // pred_check_branch
      %26 = sbr.rel (0) target = $region13
    $region12: #{cifar_gen_forward.7} parent=1 // pred_region
      %27 = dma.done [#allocation3], 512
    $region13: #{cifar_gen_forward.7} parent=1 // pred_fallthru
      _
    %v29 = vld [vmem:[%s0] sm:$0xf]
    %v30 = vld [vmem:[%s0 + $0x4] sm:$0xf]
    %v31 = vld [vmem:[#allocation2] sm:$0xff]
    %v32 = vld [vmem:[#allocation2 + $0x8] sm:$0xff]
    %v33 = vld [vmem:[#allocation2 + $0x10] sm:$0xff]
    %v34 = vld [vmem:[#allocation2 + $0x18] sm:$0xff]
    %v37 = vunpack.c.l.b16 %v29
    %v38 = vunpack.c.l.b16 %v30
    %v39 = vpack.c.b16 %v38, %v37
    %v44 = vunpack.c.l.b16 %v31
    %v45 = vunpack.c.h.b16 %v31
    %v46 = vunpack.c.l.b16 %v32
    %v47 = vunpack.c.h.b16 %v32
    %v48 = vunpack.c.l.b16 %v33
    %v49 = vunpack.c.h.b16 %v33
    %v50 = vunpack.c.l.b16 %v34
    %v51 = vunpack.c.h.b16 %v34
    %v52 = vpack.c.b16 %v48, %v44
    %v53 = vpack.c.b16 %v49, %v45
    %v54 = vpack.c.b16 %v50, %v46
    %v55 = vpack.c.b16 %v51, %v47
    %vm60 = vcmask 130048
    %v62 = vsel %vm60, %v39, 0
    %64 = vmatprep.subr.bf16.mxu0 %v53
    %65 = vmatpush1.bf16.msra.mxu0 %v52
    %66 = vmatprep.subr.bf16.mxu0 0
    %67 = vmatpush1.bf16.msra.mxu0 0
    %68 = vmatprep.subr.bf16.mxu0 0
    %69 = vmatpush1.bf16.msra.mxu0 0
    %70 = vmatprep.subr.bf16.mxu0 0
    %71 = vmatpush1.bf16.msra.mxu0 0
    %72 = vmatprep.subr.bf16.mxu0 0
    %73 = vmatpush1.bf16.msra.mxu0 0
    %74 = vmatprep.subr.bf16.mxu0 0
    %75 = vmatpush1.bf16.msra.mxu0 0
    %76 = vmatprep.subr.bf16.mxu0 0
    %77 = vmatpush1.bf16.msra.mxu0 0
    %78 = vmatprep.subr.bf16.mxu0 0
    %79 = vmatpush1.bf16.msra.mxu0 0
    %80 = vmatprep.subr.bf16.mxu0 0
    %81 = vmatpush1.bf16.msra.mxu0 0
    %82 = vmatprep.subr.bf16.mxu0 0
    %83 = vmatpush1.bf16.msra.mxu0 0
    %84 = vmatprep.subr.bf16.mxu0 0
    %85 = vmatpush1.bf16.msra.mxu0 0
    %86 = vmatprep.subr.bf16.mxu0 0
    %87 = vmatpush1.bf16.msra.mxu0 0
    %88 = vmatprep.subr.bf16.mxu0 0
    %89 = vmatpush1.bf16.msra.mxu0 0
    %90 = vmatprep.subr.bf16.mxu0 0
    %91 = vmatpush1.bf16.msra.mxu0 0
    %92 = vmatprep.subr.bf16.mxu0 0
    %93 = vmatpush1.bf16.msra.mxu0 0
    %94 = vmatprep.subr.bf16.mxu0 0
    %95 = vmatpush1.bf16.msra.mxu0 0
    %96 = vmatprep.mubr.bf16.mxu0 0
    %97 = vmatmul.mubr.bf16.gmra.mrb[0].mxu0 %v62
    %v98 = vpop.f32.mrb[0].mxu0
    %v99 = vadd.f32 0.0, %v98
    %v100 = vpop.f32.mrb[0].mxu0
    %v101 = vadd.f32 0.0, %v100
    %v102 = vpop.f32.mrb[0].mxu0
    %v103 = vadd.f32 0.0, %v102
    %v104 = vpop.f32.mrb[0].mxu0
    %v105 = vadd.f32 0.0, %v104
    %106 = vdwg.mxu0
    %107 = vmatprep.subr.bf16.mxu0 %v55
    %108 = vmatpush1.bf16.msra.mxu0 %v54
    %109 = vmatprep.subr.bf16.mxu0 0
    %110 = vmatpush1.bf16.msra.mxu0 0
    %111 = vmatprep.subr.bf16.mxu0 0
    %112 = vmatpush1.bf16.msra.mxu0 0
    %113 = vmatprep.subr.bf16.mxu0 0
    %114 = vmatpush1.bf16.msra.mxu0 0
    %115 = vmatprep.subr.bf16.mxu0 0
    %116 = vmatpush1.bf16.msra.mxu0 0
    %117 = vmatprep.subr.bf16.mxu0 0
    %118 = vmatpush1.bf16.msra.mxu0 0
    %119 = vmatprep.subr.bf16.mxu0 0
    %120 = vmatpush1.bf16.msra.mxu0 0
    %121 = vmatprep.subr.bf16.mxu0 0
    %122 = vmatpush1.bf16.msra.mxu0 0
    %123 = vmatprep.subr.bf16.mxu0 0
    %124 = vmatpush1.bf16.msra.mxu0 0
    %125 = vmatprep.subr.bf16.mxu0 0
    %126 = vmatpush1.bf16.msra.mxu0 0
    %127 = vmatprep.subr.bf16.mxu0 0
    %128 = vmatpush1.bf16.msra.mxu0 0
    %129 = vmatprep.subr.bf16.mxu0 0
    %130 = vmatpush1.bf16.msra.mxu0 0
    %131 = vmatprep.subr.bf16.mxu0 0
    %132 = vmatpush1.bf16.msra.mxu0 0
    %133 = vmatprep.subr.bf16.mxu0 0
    %134 = vmatpush1.bf16.msra.mxu0 0
    %135 = vmatprep.subr.bf16.mxu0 0
    %136 = vmatpush1.bf16.msra.mxu0 0
    %137 = vmatprep.subr.bf16.mxu0 0
    %138 = vmatpush1.bf16.msra.mxu0 0
    %139 = vmatprep.mubr.bf16.mxu0 0
    %140 = vmatmul.mubr.bf16.gmra.mrb[0].mxu0 %v62
    %v141 = vpop.f32.mrb[0].mxu0
    %v142 = vadd.f32 0.0, %v141
    %v143 = vpop.f32.mrb[0].mxu0
    %v144 = vadd.f32 0.0, %v143
    %v145 = vpop.f32.mrb[0].mxu0
    %v146 = vadd.f32 0.0, %v145
    %v147 = vpop.f32.mrb[0].mxu0
    %v148 = vadd.f32 0.0, %v147
    %149 = vdwg.mxu0
    %v150 = vpack.c.bf16 %v103, %v99
    %v151 = vpack.c.bf16 %v105, %v101
    %v152 = vpack.c.bf16 %v146, %v142
    %v153 = vpack.c.bf16 %v148, %v144
    %v158 = vunpack.c.l.b16 %v150
    %v159 = vunpack.c.l.b16 %v151
    %v160 = vunpack.c.l.b16 %v152
    %v161 = vunpack.c.l.b16 %v153
    %v162 = vunpack.c.h.b16 %v150
    %v163 = vunpack.c.h.b16 %v151
    %v164 = vunpack.c.h.b16 %v152
    %v165 = vunpack.c.h.b16 %v153
    %v166 = vpack.c.b16 %v159, %v158
    %v167 = vpack.c.b16 %v161, %v160
    %v168 = vpack.c.b16 %v163, %v162
    %v169 = vpack.c.b16 %v165, %v164
    %174 = vst [vmem:[%s2] sm:$0xff] %v166
    %175 = vst [vmem:[%s2 + $0x8] sm:$0xff] %v167
    %176 = vst [vmem:[%s2 + $0x10] sm:$0xff] %v168
    %177 = vst [vmem:[%s2 + $0x18] sm:$0xff] %v169
    %v178 = vadd.f32 %v99, %v103
    %v179 = vrot.slane %v178, 4
    %v180 = vadd.f32 %v178, %v179
    %v181 = vrot.slane %v180, 2
    %v182 = vadd.f32 %v180, %v181
    %v183 = vrot.slane %v182, 1
    %v184 = vadd.f32 %v182, %v183
    %v185 = vadd.f32 %v101, %v105
    %v186 = vrot.slane %v185, 4
    %v187 = vadd.f32 %v185, %v186
    %v188 = vrot.slane %v187, 2
    %v189 = vadd.f32 %v187, %v188
    %v190 = vrot.slane %v189, 1
    %v191 = vadd.f32 %v189, %v190
    %v192 = vadd.f32 %v142, %v146
    %v193 = vrot.slane %v192, 4
    %v194 = vadd.f32 %v192, %v193
    %v195 = vrot.slane %v194, 2
    %v196 = vadd.f32 %v194, %v195
    %v197 = vrot.slane %v196, 1
    %v198 = vadd.f32 %v196, %v197
    %v199 = vadd.f32 %v144, %v148
    %v200 = vrot.slane %v199, 4
    %v201 = vadd.f32 %v199, %v200
    %v202 = vrot.slane %v201, 2
    %v203 = vadd.f32 %v201, %v202
    %v204 = vrot.slane %v203, 1
    %v205 = vadd.f32 %v203, %v204
    %v206 = vmul.f32 %v99, %v99
    %v207 = vmul.f32 %v101, %v101
    %v208 = vmul.f32 %v142, %v142
    %v209 = vmul.f32 %v144, %v144
    %v210 = vmul.f32 %v103, %v103
    %v211 = vmul.f32 %v105, %v105
    %v212 = vmul.f32 %v146, %v146
    %v213 = vmul.f32 %v148, %v148
    %v214 = vadd.f32 %v206, %v210
    %v215 = vrot.slane %v214, 4
    %v216 = vadd.f32 %v214, %v215
    %v217 = vrot.slane %v216, 2
    %v218 = vadd.f32 %v216, %v217
    %v219 = vrot.slane %v218, 1
    %v220 = vadd.f32 %v218, %v219
    %v221 = vadd.f32 %v207, %v211
    %v222 = vrot.slane %v221, 4
    %v223 = vadd.f32 %v221, %v222
    %v224 = vrot.slane %v223, 2
    %v225 = vadd.f32 %v223, %v224
    %v226 = vrot.slane %v225, 1
    %v227 = vadd.f32 %v225, %v226
    %v228 = vadd.f32 %v208, %v212
    %v229 = vrot.slane %v228, 4
    %v230 = vadd.f32 %v228, %v229
    %v231 = vrot.slane %v230, 2
    %v232 = vadd.f32 %v230, %v231
    %v233 = vrot.slane %v232, 1
    %v234 = vadd.f32 %v232, %v233
    %v235 = vadd.f32 %v209, %v213
    %v236 = vrot.slane %v235, 4
    %v237 = vadd.f32 %v235, %v236
    %v238 = vrot.slane %v237, 2
    %v239 = vadd.f32 %v237, %v238
    %v240 = vrot.slane %v239, 1
    %v241 = vadd.f32 %v239, %v240
    %v246 = vcombine.low %v184, %v191
    %v247 = vcombine.low %v198, %v205
    %v249 = vunpack.c.l.s4 1966171168
    %v250 = vunpack.c.0.s8 %v249
    %v251 = vlaneseq
    %v252 = vshrl.u32 %v251, 7
    %v253 = vsub.s32 %v250, %v252
    %v254 = vrot.slane %v246, %v253
    %v256 = vunpack.c.l.s4 1966171168
    %v257 = vunpack.c.0.s8 %v256
    %v258 = vlaneseq
    %v259 = vshrl.u32 %v258, 7
    %v260 = vsub.s32 %v257, %v259
    %v261 = vrot.slane %v247, %v260
    %v262 = vcombine.low %v254, %v261
    %v264 = vunpack.c.l.s4 1966171168
    %v265 = vunpack.c.0.s8 %v264
    %v266 = vlaneseq
    %v267 = vshrl.u32 %v266, 7
    %v268 = vsub.s32 %v265, %v267
    %v269 = vrot.slane %v262, %v268
    %v271 = vlaneseq
    %vm272 = vcmp.ge.s32.totalorder %v271, 0
    %vm273 = vcmp.lt.s32.totalorder %v271, 512
    %vm274 = vmand %vm272, %vm273
    %275 = vst.msk [vmem:[%s3] sm:$0xf] %vm274, %v269
    %v280 = vcombine.low %v220, %v227
    %v281 = vcombine.low %v234, %v241
    %v283 = vunpack.c.l.s4 1966171168
    %v284 = vunpack.c.0.s8 %v283
    %v285 = vlaneseq
    %v286 = vshrl.u32 %v285, 7
    %v287 = vsub.s32 %v284, %v286
    %v288 = vrot.slane %v280, %v287
    %v290 = vunpack.c.l.s4 1966171168
    %v291 = vunpack.c.0.s8 %v290
    %v292 = vlaneseq
    %v293 = vshrl.u32 %v292, 7
    %v294 = vsub.s32 %v291, %v293
    %v295 = vrot.slane %v281, %v294
    %v296 = vcombine.low %v288, %v295
    %v298 = vunpack.c.l.s4 1966171168
    %v299 = vunpack.c.0.s8 %v298
    %v300 = vlaneseq
    %v301 = vshrl.u32 %v300, 7
    %v302 = vsub.s32 %v299, %v301
    %v303 = vrot.slane %v296, %v302
    %305 = vst.msk [vmem:[%s4] sm:$0xf] %vm274, %v303
    // Predicated region
    $region14: #{cifar_gen_forward.7} parent=1 // pred_check
      _
    $region15: #{cifar_gen_forward.7} parent=1 // pred_check_branch
      %307 = sbr.rel (0) target = $region17
    $region16: #{cifar_gen_forward.7} parent=1 // pred_region
      _
    $region17: #{cifar_gen_forward.7} parent=1 // pred_fallthru
      _
    // Predicated region
    $region18: #{cifar_gen_forward.7} parent=1 // pred_check
      _
    $region19: #{cifar_gen_forward.7} parent=1 // pred_check_branch
      %309 = sbr.rel (0) target = $region21
    $region20: #{cifar_gen_forward.7} parent=1 // pred_region
      _
    $region21: #{cifar_gen_forward.7} parent=1 // pred_fallthru
      _
    // Predicated region
    $region22: #{cifar_gen_forward.7} parent=1 // pred_check
      _
    $region23: #{cifar_gen_forward.7} parent=1 // pred_check_branch
      %311 = sbr.rel (0) target = $region25
    $region24: #{cifar_gen_forward.7} parent=1 // pred_region
      _
    $region25: #{cifar_gen_forward.7} parent=1 // pred_fallthru
      _
    // Predicated region
    $region26: #{cifar_gen_forward.7} parent=1 // pred_check
      _
    $region27: #{cifar_gen_forward.7} parent=1 // pred_check_branch
      %313 = sbr.rel (0) target = $region29
    $region28: #{cifar_gen_forward.7} parent=1 // pred_region
      _
    $region29: #{cifar_gen_forward.7} parent=1 // pred_fallthru
      _
    // Predicated region
    $region30: #{cifar_gen_forward.7} parent=1 // pred_check
      _
    $region31: #{cifar_gen_forward.7} parent=1 // pred_check_branch
      %315 = sbr.rel (0) target = $region33
    $region32: #{cifar_gen_forward.7} parent=1 // pred_region
      _
    $region33: #{cifar_gen_forward.7} parent=1 // pred_fallthru
      _
    // Predicated region
    $region34: #{cifar_gen_forward.7} parent=1 // pred_check
      _
    $region35: #{cifar_gen_forward.7} parent=1 // pred_check_branch
      %317 = sbr.rel (0) target = $region37
    $region36: #{cifar_gen_forward.7} parent=1 // pred_region
      _
    $region37: #{cifar_gen_forward.7} parent=1 // pred_fallthru
      _
    %318 = vsyncpa [#allocation3], 1

// kernel: tile.48
$region0: #{tile.48}
  #allocation0 [shape = 's32[1]{0}', space=sflag, size = 0x4, scoped, tag = 'scoped memory for tile.48']
  %s0 = inlined_call_operand.vmem [shape: f32[16], index: 0, kind: input, shape index: {}]
  %s1 = inlined_call_operand.vmem [shape: f32[8,16], index: 1, kind: output, shape index: {}]
  // Predicated region
  $region2: #{tile.48} parent=0 // pred_check
    _
  $region3: #{tile.48} parent=0 // pred_check_branch
    %3 = sbr.rel (0) target = $region5
  $region4: #{tile.48} parent=0 // pred_region
    _
  $region5: #{tile.48} parent=0 // pred_fallthru
    _
  %v4 = vld [vmem:[%s0] ss:$0 sm:$0xff]
  %5 = vst [vmem:[%s1] sm:$0xff] %v4

// kernel: cifar_gen_forward.10
$region0: #{cifar_gen_forward.10}
  #allocation0 [shape = 'u32[]', space=smem, size = 0x4, offset = 0x4, fixed_abs, tag = 'smem constant byte address 0x4 - core index']
  #allocation1 [shape = 'u32[144,128]{1,0:T(1,128)}', space=vmem, size = 0x12000, scoped, tag = 'internal scratch']
  %s0 = inlined_call_operand.vmem [shape: bf16[16,128], index: 0, kind: input, shape index: {}]
  %s1 = inlined_call_operand.vmem [shape: f32[1,128], index: 1, kind: input, shape index: {}]
  %s2 = inlined_call_operand.vmem [shape: f32[1,128], index: 2, kind: input, shape index: {}]
  %s3 = inlined_call_operand.vmem [shape: bf16[16,128], index: 3, kind: output, shape index: {}]
  %s4 = sld [smem:[#allocation0]]
  $region22: #{cifar_gen_forward.10} parent=0
    _
  %s6 = ssub.s32 1, %s4
  %s7 = scalar_select 0, %s6, %s4
  // Predicated region
  $region2: #{cifar_gen_forward.10} parent=0 // pred_check
    _
  $region3: #{cifar_gen_forward.10} parent=0 // pred_check_branch
    %9 = sbr.rel (0) target = $region5
  $region4: #{cifar_gen_forward.10} parent=0 // pred_region
    _
  $region5: #{cifar_gen_forward.10} parent=0 // pred_fallthru
    _
  // Predicated region
  $region6: #{cifar_gen_forward.10} parent=0 // pred_check
    _
  $region7: #{cifar_gen_forward.10} parent=0 // pred_check_branch
    %11 = sbr.rel (0) target = $region9
  $region8: #{cifar_gen_forward.10} parent=0 // pred_region
    _
  $region9: #{cifar_gen_forward.10} parent=0 // pred_fallthru
    _
  // Predicated region
  $region10: #{cifar_gen_forward.10} parent=0 // pred_check
    _
  $region11: #{cifar_gen_forward.10} parent=0 // pred_check_branch
    %13 = sbr.rel (0) target = $region13
  $region12: #{cifar_gen_forward.10} parent=0 // pred_region
    _
  $region13: #{cifar_gen_forward.10} parent=0 // pred_fallthru
    _
  %v14 = vld [vmem:[%s0] sm:$0xf]
  %v15 = vld [vmem:[%s0 + $0x4] sm:$0xf]
  %v16 = vunpack.c.l.bf16 %v14
  %v17 = vunpack.c.l.bf16 %v15
  %v18 = vld [vmem:[%s1] sm:$0x1]
  %v20 = vlaneseq
  %v21 = vshrl.u32 %v20, 7
  %v22 = vsub.s32 0, %v21
  %v23 = vrot.slane %v18, %v22
  %v25 = vmul.f32 %v16, %v23
  %v26 = vmul.f32 %v17, %v23
  %v27 = vld [vmem:[%s2] sm:$0x1]
  %v29 = vlaneseq
  %v30 = vshrl.u32 %v29, 7
  %v31 = vsub.s32 0, %v30
  %v32 = vrot.slane %v27, %v31
  %v34 = vadd.f32 %v25, %v32
  %v35 = vadd.f32 %v26, %v32
  %v36 = vmax.f32 %v34, 0.0
  %v37 = vmax.f32 %v35, 0.0
  %v38 = vpack.c.bf16 %v37, %v36
  %v40 = vunpack.c.l.b16 %v38
  %v41 = vunpack.c.h.b16 %v38
  %v42 = vpack.c.b16 %v40, %v40
  %v43 = vpack.c.b16 %v41, %v41
  %46 = vst [vmem:[%s3] sm:$0xf] %v42
  %47 = vst [vmem:[%s3 + $0x4] sm:$0xf] %v43
  // Predicated region
  $region14: #{cifar_gen_forward.10} parent=0 // pred_check
    _
  $region15: #{cifar_gen_forward.10} parent=0 // pred_check_branch
    %49 = sbr.rel (0) target = $region17
  $region16: #{cifar_gen_forward.10} parent=0 // pred_region
    _
  $region17: #{cifar_gen_forward.10} parent=0 // pred_fallthru
    _
  // Predicated region
  $region18: #{cifar_gen_forward.10} parent=0 // pred_check
    _
  $region19: #{cifar_gen_forward.10} parent=0 // pred_check_branch
    %51 = sbr.rel (0) target = $region21
  $region20: #{cifar_gen_forward.10} parent=0 // pred_region
    _
  $region21: #{cifar_gen_forward.10} parent=0 // pred_fallthru
    _

// kernel: cifar_gen_forward.9
$region0: #{cifar_gen_forward.9}
  #allocation0 [shape = 'u32[]', space=smem, size = 0x4, offset = 0x4, fixed_abs, tag = 'smem constant byte address 0x4 - core index']
  #allocation1 [shape = 'u32[144,128]{1,0:T(1,128)}', space=vmem, size = 0x12000, scoped, tag = 'internal scratch']
  %s0 = inlined_call_operand.vmem [shape: bf16[16,576], index: 0, kind: input, shape index: {}]
  %s1 = inlined_call_operand.hbm [shape: bf16[576,128], index: 1, kind: input, shape index: {}]
  %s2 = inlined_call_operand.vmem [shape: bf16[16,128], index: 2, kind: output, shape index: {0}]
  %s3 = inlined_call_operand.vmem [shape: f32[1,1,128], index: 3, kind: output, shape index: {1}]
  %s4 = inlined_call_operand.vmem [shape: f32[1,1,128], index: 4, kind: output, shape index: {2}]
  %5 = xla_tuple %s2, %s3, %s4
  %s6 = sld [smem:[#allocation0]]
  $region38: #{cifar_gen_forward.9} parent=0
    _
  %s8 = ssub.s32 1, %s6
  %s9 = scalar_select 0, %s8, %s6
  $region1: #{cifar_gen_forward.9} parent=0
    #allocation2 [shape = 'u8[147456]{0}', space=vmem, size = 0x24000, scoped, tag = 'input window, operand 1, single buffered']
    #allocation3 [shape = 's32[1]{0}', space=sflag, size = 0x4, scoped, tag = 'scoped memory for cifar_gen_forward.9']
    %10 = vsyncpa [#allocation3], 0
    // Predicated region
    $region2: #{cifar_gen_forward.9} parent=1 // pred_check
      _
    $region3: #{cifar_gen_forward.9} parent=1 // pred_check_branch
      %12 = sbr.rel (0) target = $region5
    $region4: #{cifar_gen_forward.9} parent=1 // pred_region
      _
    $region5: #{cifar_gen_forward.9} parent=1 // pred_fallthru
      _
    // Predicated region
    $region6: #{cifar_gen_forward.9} parent=1 // pred_check
      _
    $region7: #{cifar_gen_forward.9} parent=1 // pred_check_branch
      %14 = sbr.rel (0) target = $region9
    $region8: #{cifar_gen_forward.9} parent=1 // pred_region
      %s16 = ssub.s32 4608, 4608
      %17 = vsyncadd [#allocation3], %s16
      %s18 = sshll.u32 [#allocation2], 4
      %s19 = int_to_ptr.vmem [resolvable:$true] %s18
      %24 = dma.hbm_to_vmem [thread:$0]  %s1, 4608, %s19, [#allocation3], 64, 64, 4
    $region9: #{cifar_gen_forward.9} parent=1 // pred_fallthru
      _
    // Predicated region
    $region10: #{cifar_gen_forward.9} parent=1 // pred_check
      _
    $region11: #{cifar_gen_forward.9} parent=1 // pred_check_branch
      %26 = sbr.rel (0) target = $region13
    $region12: #{cifar_gen_forward.9} parent=1 // pred_region
      %27 = dma.done [#allocation3], 4608
    $region13: #{cifar_gen_forward.9} parent=1 // pred_fallthru
      _
    %v29 = vld [vmem:[%s0] sm:$0xff]
    %v30 = vld [vmem:[%s0 + $0x8] sm:$0xff]
    %v31 = vld [vmem:[%s0 + $0x10] sm:$0xf]
    %v32 = vld [vmem:[%s0 + $0x14] sm:$0xff]
    %v33 = vld [vmem:[%s0 + $0x1c] sm:$0xff]
    %v34 = vld [vmem:[%s0 + $0x24] sm:$0xf]
    %v35 = vld [vmem:[#allocation2] sm:$0xf]
    %v36 = vld [vmem:[#allocation2 + $0x4] sm:$0xf]
    %v37 = vld [vmem:[#allocation2 + $0x8] sm:$0xf]
    %v38 = vld [vmem:[#allocation2 + $0xc] sm:$0xf]
    %v39 = vld [vmem:[#allocation2 + $0x10] sm:$0xf]
    %v40 = vld [vmem:[#allocation2 + $0x14] sm:$0xf]
    %v41 = vld [vmem:[#allocation2 + $0x18] sm:$0xf]
    %v42 = vld [vmem:[#allocation2 + $0x1c] sm:$0xf]
    %v43 = vld [vmem:[#allocation2 + $0x20] sm:$0xf]
    %v44 = vld [vmem:[#allocation2 + $0x24] sm:$0xf]
    %v45 = vld [vmem:[#allocation2 + $0x28] sm:$0xf]
    %v46 = vld [vmem:[#allocation2 + $0x2c] sm:$0xf]
    %v47 = vld [vmem:[#allocation2 + $0x30] sm:$0xf]
    %v48 = vld [vmem:[#allocation2 + $0x34] sm:$0xf]
    %v49 = vld [vmem:[#allocation2 + $0x38] sm:$0xf]
    %v50 = vld [vmem:[#allocation2 + $0x3c] sm:$0xf]
    %v51 = vld [vmem:[#allocation2 + $0x40] sm:$0xf]
    %v52 = vld [vmem:[#allocation2 + $0x44] sm:$0xf]
    %v53 = vld [vmem:[#allocation2 + $0x48] sm:$0xf]
    %v54 = vld [vmem:[#allocation2 + $0x4c] sm:$0xf]
    %v55 = vld [vmem:[#allocation2 + $0x50] sm:$0xf]
    %v56 = vld [vmem:[#allocation2 + $0x54] sm:$0xf]
    %v57 = vld [vmem:[#allocation2 + $0x58] sm:$0xf]
    %v58 = vld [vmem:[#allocation2 + $0x5c] sm:$0xf]
    %v59 = vld [vmem:[#allocation2 + $0x60] sm:$0xf]
    %v60 = vld [vmem:[#allocation2 + $0x64] sm:$0xf]
    %v61 = vld [vmem:[#allocation2 + $0x68] sm:$0xf]
    %v62 = vld [vmem:[#allocation2 + $0x6c] sm:$0xf]
    %v63 = vld [vmem:[#allocation2 + $0x70] sm:$0xf]
    %v64 = vld [vmem:[#allocation2 + $0x74] sm:$0xf]
    %v65 = vld [vmem:[#allocation2 + $0x78] sm:$0xf]
    %v66 = vld [vmem:[#allocation2 + $0x7c] sm:$0xf]
    %v67 = vld [vmem:[#allocation2 + $0x80] sm:$0xf]
    %v68 = vld [vmem:[#allocation2 + $0x84] sm:$0xf]
    %v69 = vld [vmem:[#allocation2 + $0x88] sm:$0xf]
    %v70 = vld [vmem:[#allocation2 + $0x8c] sm:$0xf]
    %v71 = vld [vmem:[#allocation2 + $0x90] sm:$0xf]
    %v72 = vld [vmem:[#allocation2 + $0x94] sm:$0xf]
    %v73 = vld [vmem:[#allocation2 + $0x98] sm:$0xf]
    %v74 = vld [vmem:[#allocation2 + $0x9c] sm:$0xf]
    %v75 = vld [vmem:[#allocation2 + $0xa0] sm:$0xf]
    %v76 = vld [vmem:[#allocation2 + $0xa4] sm:$0xf]
    %v77 = vld [vmem:[#allocation2 + $0xa8] sm:$0xf]
    %v78 = vld [vmem:[#allocation2 + $0xac] sm:$0xf]
    %v79 = vld [vmem:[#allocation2 + $0xb0] sm:$0xf]
    %v80 = vld [vmem:[#allocation2 + $0xb4] sm:$0xf]
    %v81 = vld [vmem:[#allocation2 + $0xb8] sm:$0xf]
    %v82 = vld [vmem:[#allocation2 + $0xbc] sm:$0xf]
    %v83 = vld [vmem:[#allocation2 + $0xc0] sm:$0xf]
    %v84 = vld [vmem:[#allocation2 + $0xc4] sm:$0xf]
    %v85 = vld [vmem:[#allocation2 + $0xc8] sm:$0xf]
    %v86 = vld [vmem:[#allocation2 + $0xcc] sm:$0xf]
    %v87 = vld [vmem:[#allocation2 + $0xd0] sm:$0xf]
    %v88 = vld [vmem:[#allocation2 + $0xd4] sm:$0xf]
    %v89 = vld [vmem:[#allocation2 + $0xd8] sm:$0xf]
    %v90 = vld [vmem:[#allocation2 + $0xdc] sm:$0xf]
    %v91 = vld [vmem:[#allocation2 + $0xe0] sm:$0xf]
    %v92 = vld [vmem:[#allocation2 + $0xe4] sm:$0xf]
    %v93 = vld [vmem:[#allocation2 + $0xe8] sm:$0xf]
    %v94 = vld [vmem:[#allocation2 + $0xec] sm:$0xf]
    %v95 = vld [vmem:[#allocation2 + $0xf0] sm:$0xf]
    %v96 = vld [vmem:[#allocation2 + $0xf4] sm:$0xf]
    %v97 = vld [vmem:[#allocation2 + $0xf8] sm:$0xf]
    %v98 = vld [vmem:[#allocation2 + $0xfc] sm:$0xf]
    %v99 = vld [vmem:[#allocation2 + $0x100] sm:$0xf]
    %v100 = vld [vmem:[#allocation2 + $0x104] sm:$0xf]
    %v101 = vld [vmem:[#allocation2 + $0x108] sm:$0xf]
    %v102 = vld [vmem:[#allocation2 + $0x10c] sm:$0xf]
    %v103 = vld [vmem:[#allocation2 + $0x110] sm:$0xf]
    %v104 = vld [vmem:[#allocation2 + $0x114] sm:$0xf]
    %v105 = vld [vmem:[#allocation2 + $0x118] sm:$0xf]
    %v106 = vld [vmem:[#allocation2 + $0x11c] sm:$0xf]
    %v113 = vunpack.c.l.b16 %v29
    %v114 = vunpack.c.h.b16 %v29
    %v115 = vunpack.c.l.b16 %v30
    %v116 = vunpack.c.h.b16 %v30
    %v117 = vunpack.c.l.b16 %v31
    %v118 = vunpack.c.l.b16 %v32
    %v119 = vunpack.c.h.b16 %v32
    %v120 = vunpack.c.l.b16 %v33
    %v121 = vunpack.c.h.b16 %v33
    %v122 = vunpack.c.l.b16 %v34
    %v123 = vpack.c.b16 %v118, %v113
    %v124 = vpack.c.b16 %v119, %v114
    %v125 = vpack.c.b16 %v120, %v115
    %v126 = vpack.c.b16 %v121, %v116
    %v127 = vpack.c.b16 %v122, %v117
    %v204 = vunpack.c.l.b16 %v35
    %v205 = vunpack.c.l.b16 %v36
    %v206 = vunpack.c.l.b16 %v37
    %v207 = vunpack.c.l.b16 %v38
    %v208 = vunpack.c.l.b16 %v39
    %v209 = vunpack.c.l.b16 %v40
    %v210 = vunpack.c.l.b16 %v41
    %v211 = vunpack.c.l.b16 %v42
    %v212 = vunpack.c.l.b16 %v43
    %v213 = vunpack.c.l.b16 %v44
    %v214 = vunpack.c.l.b16 %v45
    %v215 = vunpack.c.l.b16 %v46
    %v216 = vunpack.c.l.b16 %v47
    %v217 = vunpack.c.l.b16 %v48
    %v218 = vunpack.c.l.b16 %v49
    %v219 = vunpack.c.l.b16 %v50
    %v220 = vunpack.c.l.b16 %v51
    %v221 = vunpack.c.l.b16 %v52
    %v222 = vunpack.c.l.b16 %v53
    %v223 = vunpack.c.l.b16 %v54
    %v224 = vunpack.c.l.b16 %v55
    %v225 = vunpack.c.l.b16 %v56
    %v226 = vunpack.c.l.b16 %v57
    %v227 = vunpack.c.l.b16 %v58
    %v228 = vunpack.c.l.b16 %v59
    %v229 = vunpack.c.l.b16 %v60
    %v230 = vunpack.c.l.b16 %v61
    %v231 = vunpack.c.l.b16 %v62
    %v232 = vunpack.c.l.b16 %v63
    %v233 = vunpack.c.l.b16 %v64
    %v234 = vunpack.c.l.b16 %v65
    %v235 = vunpack.c.l.b16 %v66
    %v236 = vunpack.c.l.b16 %v67
    %v237 = vunpack.c.l.b16 %v68
    %v238 = vunpack.c.l.b16 %v69
    %v239 = vunpack.c.l.b16 %v70
    %v240 = vunpack.c.l.b16 %v71
    %v241 = vunpack.c.l.b16 %v72
    %v242 = vunpack.c.l.b16 %v73
    %v243 = vunpack.c.l.b16 %v74
    %v244 = vunpack.c.l.b16 %v75
    %v245 = vunpack.c.l.b16 %v76
    %v246 = vunpack.c.l.b16 %v77
    %v247 = vunpack.c.l.b16 %v78
    %v248 = vunpack.c.l.b16 %v79
    %v249 = vunpack.c.l.b16 %v80
    %v250 = vunpack.c.l.b16 %v81
    %v251 = vunpack.c.l.b16 %v82
    %v252 = vunpack.c.l.b16 %v83
    %v253 = vunpack.c.l.b16 %v84
    %v254 = vunpack.c.l.b16 %v85
    %v255 = vunpack.c.l.b16 %v86
    %v256 = vunpack.c.l.b16 %v87
    %v257 = vunpack.c.l.b16 %v88
    %v258 = vunpack.c.l.b16 %v89
    %v259 = vunpack.c.l.b16 %v90
    %v260 = vunpack.c.l.b16 %v91
    %v261 = vunpack.c.l.b16 %v92
    %v262 = vunpack.c.l.b16 %v93
    %v263 = vunpack.c.l.b16 %v94
    %v264 = vunpack.c.l.b16 %v95
    %v265 = vunpack.c.l.b16 %v96
    %v266 = vunpack.c.l.b16 %v97
    %v267 = vunpack.c.l.b16 %v98
    %v268 = vunpack.c.l.b16 %v99
    %v269 = vunpack.c.l.b16 %v100
    %v270 = vunpack.c.l.b16 %v101
    %v271 = vunpack.c.l.b16 %v102
    %v272 = vunpack.c.l.b16 %v103
    %v273 = vunpack.c.l.b16 %v104
    %v274 = vunpack.c.l.b16 %v105
    %v275 = vunpack.c.l.b16 %v106
    %v276 = vpack.c.b16 %v205, %v204
    %v277 = vpack.c.b16 %v207, %v206
    %v278 = vpack.c.b16 %v209, %v208
    %v279 = vpack.c.b16 %v211, %v210
    %v280 = vpack.c.b16 %v213, %v212
    %v281 = vpack.c.b16 %v215, %v214
    %v282 = vpack.c.b16 %v217, %v216
    %v283 = vpack.c.b16 %v219, %v218
    %v284 = vpack.c.b16 %v221, %v220
    %v285 = vpack.c.b16 %v223, %v222
    %v286 = vpack.c.b16 %v225, %v224
    %v287 = vpack.c.b16 %v227, %v226
    %v288 = vpack.c.b16 %v229, %v228
    %v289 = vpack.c.b16 %v231, %v230
    %v290 = vpack.c.b16 %v233, %v232
    %v291 = vpack.c.b16 %v235, %v234
    %v292 = vpack.c.b16 %v237, %v236
    %v293 = vpack.c.b16 %v239, %v238
    %v294 = vpack.c.b16 %v241, %v240
    %v295 = vpack.c.b16 %v243, %v242
    %v296 = vpack.c.b16 %v245, %v244
    %v297 = vpack.c.b16 %v247, %v246
    %v298 = vpack.c.b16 %v249, %v248
    %v299 = vpack.c.b16 %v251, %v250
    %v300 = vpack.c.b16 %v253, %v252
    %v301 = vpack.c.b16 %v255, %v254
    %v302 = vpack.c.b16 %v257, %v256
    %v303 = vpack.c.b16 %v259, %v258
    %v304 = vpack.c.b16 %v261, %v260
    %v305 = vpack.c.b16 %v263, %v262
    %v306 = vpack.c.b16 %v265, %v264
    %v307 = vpack.c.b16 %v267, %v266
    %v308 = vpack.c.b16 %v269, %v268
    %v309 = vpack.c.b16 %v271, %v270
    %v310 = vpack.c.b16 %v273, %v272
    %v311 = vpack.c.b16 %v275, %v274
    %vm348 = vcmask 523264
    %v350 = vsel %vm348, %v127, 0
    %352 = vmatprep.subr.bf16.mxu0 0
    %353 = vmatpush1.bf16.msra.mxu0 %v276
    %354 = vmatprep.subr.bf16.mxu0 0
    %355 = vmatpush1.bf16.msra.mxu0 %v277
    %356 = vmatprep.subr.bf16.mxu0 0
    %357 = vmatpush1.bf16.msra.mxu0 %v278
    %358 = vmatprep.subr.bf16.mxu0 0
    %359 = vmatpush1.bf16.msra.mxu0 %v279
    %360 = vmatprep.subr.bf16.mxu0 0
    %361 = vmatpush1.bf16.msra.mxu0 %v280
    %362 = vmatprep.subr.bf16.mxu0 0
    %363 = vmatpush1.bf16.msra.mxu0 %v281
    %364 = vmatprep.subr.bf16.mxu0 0
    %365 = vmatpush1.bf16.msra.mxu0 %v282
    %366 = vmatprep.subr.bf16.mxu0 0
    %367 = vmatpush1.bf16.msra.mxu0 %v283
    %368 = vmatprep.subr.bf16.mxu0 0
    %369 = vmatpush1.bf16.msra.mxu0 %v284
    %370 = vmatprep.subr.bf16.mxu0 0
    %371 = vmatpush1.bf16.msra.mxu0 %v285
    %372 = vmatprep.subr.bf16.mxu0 0
    %373 = vmatpush1.bf16.msra.mxu0 %v286
    %374 = vmatprep.subr.bf16.mxu0 0
    %375 = vmatpush1.bf16.msra.mxu0 %v287
    %376 = vmatprep.subr.bf16.mxu0 0
    %377 = vmatpush1.bf16.msra.mxu0 %v288
    %378 = vmatprep.subr.bf16.mxu0 0
    %379 = vmatpush1.bf16.msra.mxu0 %v289
    %380 = vmatprep.subr.bf16.mxu0 0
    %381 = vmatpush1.bf16.msra.mxu0 %v290
    %382 = vmatprep.subr.bf16.mxu0 0
    %383 = vmatpush1.bf16.msra.mxu0 %v291
    %384 = vmatprep.mubr.bf16.mxu0 %v124
    %385 = vmatmul.mubr.bf16.gmra.mrb[0].mxu0 %v123
    %v386 = vpop.f32.mrb[0].mxu0
    %v387 = vadd.f32 0.0, %v386
    %v388 = vpop.f32.mrb[0].mxu0
    %v389 = vpop.f32.mrb[0].mxu0
    %v390 = vadd.f32 0.0, %v389
    %v391 = vpop.f32.mrb[0].mxu0
    %392 = vdwg.mxu0
    %393 = vmatprep.subr.bf16.mxu0 0
    %394 = vmatpush1.bf16.msra.mxu0 %v292
    %395 = vmatprep.subr.bf16.mxu0 0
    %396 = vmatpush1.bf16.msra.mxu0 %v293
    %397 = vmatprep.subr.bf16.mxu0 0
    %398 = vmatpush1.bf16.msra.mxu0 %v294
    %399 = vmatprep.subr.bf16.mxu0 0
    %400 = vmatpush1.bf16.msra.mxu0 %v295
    %401 = vmatprep.subr.bf16.mxu0 0
    %402 = vmatpush1.bf16.msra.mxu0 %v296
    %403 = vmatprep.subr.bf16.mxu0 0
    %404 = vmatpush1.bf16.msra.mxu0 %v297
    %405 = vmatprep.subr.bf16.mxu0 0
    %406 = vmatpush1.bf16.msra.mxu0 %v298
    %407 = vmatprep.subr.bf16.mxu0 0
    %408 = vmatpush1.bf16.msra.mxu0 %v299
    %409 = vmatprep.subr.bf16.mxu0 0
    %410 = vmatpush1.bf16.msra.mxu0 %v300
    %411 = vmatprep.subr.bf16.mxu0 0
    %412 = vmatpush1.bf16.msra.mxu0 %v301
    %413 = vmatprep.subr.bf16.mxu0 0
    %414 = vmatpush1.bf16.msra.mxu0 %v302
    %415 = vmatprep.subr.bf16.mxu0 0
    %416 = vmatpush1.bf16.msra.mxu0 %v303
    %417 = vmatprep.subr.bf16.mxu0 0
    %418 = vmatpush1.bf16.msra.mxu0 %v304
    %419 = vmatprep.subr.bf16.mxu0 0
    %420 = vmatpush1.bf16.msra.mxu0 %v305
    %421 = vmatprep.subr.bf16.mxu0 0
    %422 = vmatpush1.bf16.msra.mxu0 %v306
    %423 = vmatprep.subr.bf16.mxu0 0
    %424 = vmatpush1.bf16.msra.mxu0 %v307
    %425 = vmatprep.mubr.bf16.mxu0 %v126
    %426 = vmatmul.mubr.bf16.gmra.mrb[0].mxu0 %v125
    %v427 = vpop.f32.mrb[0].mxu0
    %v428 = vadd.f32 %v387, %v427
    %v429 = vpop.f32.mrb[0].mxu0
    %v430 = vpop.f32.mrb[0].mxu0
    %v431 = vadd.f32 %v390, %v430
    %v432 = vpop.f32.mrb[0].mxu0
    %433 = vdwg.mxu0
    %434 = vmatprep.subr.bf16.mxu0 0
    %435 = vmatpush1.bf16.msra.mxu0 %v308
    %436 = vmatprep.subr.bf16.mxu0 0
    %437 = vmatpush1.bf16.msra.mxu0 %v309
    %438 = vmatprep.subr.bf16.mxu0 0
    %439 = vmatpush1.bf16.msra.mxu0 %v310
    %440 = vmatprep.subr.bf16.mxu0 0
    %441 = vmatpush1.bf16.msra.mxu0 %v311
    %442 = vmatprep.subr.bf16.mxu0 0
    %443 = vmatpush1.bf16.msra.mxu0 0
    %444 = vmatprep.subr.bf16.mxu0 0
    %445 = vmatpush1.bf16.msra.mxu0 0
    %446 = vmatprep.subr.bf16.mxu0 0
    %447 = vmatpush1.bf16.msra.mxu0 0
    %448 = vmatprep.subr.bf16.mxu0 0
    %449 = vmatpush1.bf16.msra.mxu0 0
    %450 = vmatprep.subr.bf16.mxu0 0
    %451 = vmatpush1.bf16.msra.mxu0 0
    %452 = vmatprep.subr.bf16.mxu0 0
    %453 = vmatpush1.bf16.msra.mxu0 0
    %454 = vmatprep.subr.bf16.mxu0 0
    %455 = vmatpush1.bf16.msra.mxu0 0
    %456 = vmatprep.subr.bf16.mxu0 0
    %457 = vmatpush1.bf16.msra.mxu0 0
    %458 = vmatprep.subr.bf16.mxu0 0
    %459 = vmatpush1.bf16.msra.mxu0 0
    %460 = vmatprep.subr.bf16.mxu0 0
    %461 = vmatpush1.bf16.msra.mxu0 0
    %462 = vmatprep.subr.bf16.mxu0 0
    %463 = vmatpush1.bf16.msra.mxu0 0
    %464 = vmatprep.subr.bf16.mxu0 0
    %465 = vmatpush1.bf16.msra.mxu0 0
    %466 = vmatprep.mubr.bf16.mxu0 0
    %467 = vmatmul.mubr.bf16.gmra.mrb[0].mxu0 %v350
    %v468 = vpop.f32.mrb[0].mxu0
    %v469 = vadd.f32 %v428, %v468
    %v470 = vpop.f32.mrb[0].mxu0
    %v471 = vpop.f32.mrb[0].mxu0
    %v472 = vadd.f32 %v431, %v471
    %v473 = vpop.f32.mrb[0].mxu0
    %474 = vdwg.mxu0
    %v475 = vpack.c.bf16 %v472, %v469
    %v477 = vunpack.c.l.b16 %v475
    %v478 = vunpack.c.h.b16 %v475
    %v479 = vpack.c.b16 %v477, %v477
    %v480 = vpack.c.b16 %v478, %v478
    %483 = vst [vmem:[%s2] sm:$0xf] %v479
    %484 = vst [vmem:[%s2 + $0x4] sm:$0xf] %v480
    %v485 = vadd.f32 %v469, %v472
    %v486 = vrot.slane %v485, 4
    %v487 = vadd.f32 %v485, %v486
    %v488 = vrot.slane %v487, 2
    %v489 = vadd.f32 %v487, %v488
    %v490 = vrot.slane %v489, 1
    %v491 = vadd.f32 %v489, %v490
    %v492 = vmul.f32 %v469, %v469
    %v493 = vmul.f32 %v472, %v472
    %v494 = vadd.f32 %v492, %v493
    %v495 = vrot.slane %v494, 4
    %v496 = vadd.f32 %v494, %v495
    %v497 = vrot.slane %v496, 2
    %v498 = vadd.f32 %v496, %v497
    %v499 = vrot.slane %v498, 1
    %v500 = vadd.f32 %v498, %v499
    %501 = vst [vmem:[%s3] sm:$0x1] %v491
    %502 = vst [vmem:[%s4] sm:$0x1] %v500
    // Predicated region
    $region14: #{cifar_gen_forward.9} parent=1 // pred_check
      _
    $region15: #{cifar_gen_forward.9} parent=1 // pred_check_branch
      %504 = sbr.rel (0) target = $region17
    $region16: #{cifar_gen_forward.9} parent=1 // pred_region
      _
    $region17: #{cifar_gen_forward.9} parent=1 // pred_fallthru
      _
    // Predicated region
    $region18: #{cifar_gen_forward.9} parent=1 // pred_check
      _
    $region19: #{cifar_gen_forward.9} parent=1 // pred_check_branch
      %506 = sbr.rel (0) target = $region21
    $region20: #{cifar_gen_forward.9} parent=1 // pred_region
      _
    $region21: #{cifar_gen_forward.9} parent=1 // pred_fallthru
      _
    // Predicated region
    $region22: #{cifar_gen_forward.9} parent=1 // pred_check
      _
    $region23: #{cifar_gen_forward.9} parent=1 // pred_check_branch
      %508 = sbr.rel (0) target = $region25
    $region24: #{cifar_gen_forward.9} parent=1 // pred_region
      _
    $region25: #{cifar_gen_forward.9} parent=1 // pred_fallthru
      _
    // Predicated region
    $region26: #{cifar_gen_forward.9} parent=1 // pred_check
      _
    $region27: #{cifar_gen_forward.9} parent=1 // pred_check_branch
      %510 = sbr.rel (0) target = $region29
    $region28: #{cifar_gen_forward.9} parent=1 // pred_region
      _
    $region29: #{cifar_gen_forward.9} parent=1 // pred_fallthru
      _
    // Predicated region
    $region30: #{cifar_gen_forward.9} parent=1 // pred_check
      _
    $region31: #{cifar_gen_forward.9} parent=1 // pred_check_branch
      %512 = sbr.rel (0) target = $region33
    $region32: #{cifar_gen_forward.9} parent=1 // pred_region
      _
    $region33: #{cifar_gen_forward.9} parent=1 // pred_fallthru
      _
    // Predicated region
    $region34: #{cifar_gen_forward.9} parent=1 // pred_check
      _
    $region35: #{cifar_gen_forward.9} parent=1 // pred_check_branch
      %514 = sbr.rel (0) target = $region37
    $region36: #{cifar_gen_forward.9} parent=1 // pred_region
      _
    $region37: #{cifar_gen_forward.9} parent=1 // pred_fallthru
      _
    %515 = vsyncpa [#allocation3], 1

// kernel: tile.58
$region0: #{tile.58}
  #allocation0 [shape = 's32[1]{0}', space=sflag, size = 0x4, scoped, tag = 'scoped memory for tile.58']
  %s0 = inlined_call_operand.vmem [shape: f32[8], index: 0, kind: input, shape index: {}]
  %s1 = inlined_call_operand.vmem [shape: f32[16,8], index: 1, kind: output, shape index: {}]
  // Predicated region
  $region2: #{tile.58} parent=0 // pred_check
    _
  $region3: #{tile.58} parent=0 // pred_check_branch
    %3 = sbr.rel (0) target = $region5
  $region4: #{tile.58} parent=0 // pred_region
    _
  $region5: #{tile.58} parent=0 // pred_fallthru
    _
  %v4 = vld [vmem:[%s0] ss:$0 sm:$0xff]
  %5 = vst [vmem:[%s1] sm:$0xff] %v4
  %s6 = scalar_lea.vmem %s1, 8
  %7 = vst [vmem:[%s6] sm:$0xff] %v4

// kernel: cifar_gen_forward.12
$region0: #{cifar_gen_forward.12}
  #allocation0 [shape = 'u32[]', space=smem, size = 0x4, offset = 0x4, fixed_abs, tag = 'smem constant byte address 0x4 - core index']
  #allocation1 [shape = 'u32[144,128]{1,0:T(1,128)}', space=vmem, size = 0x12000, scoped, tag = 'internal scratch']
  %s0 = inlined_call_operand.vmem [shape: bf16[32,128], index: 0, kind: input, shape index: {}]
  %s1 = inlined_call_operand.vmem [shape: f32[1,128], index: 1, kind: input, shape index: {}]
  %s2 = inlined_call_operand.vmem [shape: f32[1,128], index: 2, kind: input, shape index: {}]
  %s3 = inlined_call_operand.vmem [shape: bf16[32,128], index: 3, kind: output, shape index: {}]
  %s4 = sld [smem:[#allocation0]]
  $region22: #{cifar_gen_forward.12} parent=0
    _
  %s6 = ssub.s32 1, %s4
  %s7 = scalar_select 0, %s6, %s4
  // Predicated region
  $region2: #{cifar_gen_forward.12} parent=0 // pred_check
    _
  $region3: #{cifar_gen_forward.12} parent=0 // pred_check_branch
    %9 = sbr.rel (0) target = $region5
  $region4: #{cifar_gen_forward.12} parent=0 // pred_region
    _
  $region5: #{cifar_gen_forward.12} parent=0 // pred_fallthru
    _
  // Predicated region
  $region6: #{cifar_gen_forward.12} parent=0 // pred_check
    _
  $region7: #{cifar_gen_forward.12} parent=0 // pred_check_branch
    %11 = sbr.rel (0) target = $region9
  $region8: #{cifar_gen_forward.12} parent=0 // pred_region
    _
  $region9: #{cifar_gen_forward.12} parent=0 // pred_fallthru
    _
  // Predicated region
  $region10: #{cifar_gen_forward.12} parent=0 // pred_check
    _
  $region11: #{cifar_gen_forward.12} parent=0 // pred_check_branch
    %13 = sbr.rel (0) target = $region13
  $region12: #{cifar_gen_forward.12} parent=0 // pred_region
    _
  $region13: #{cifar_gen_forward.12} parent=0 // pred_fallthru
    _
  %v14 = vld [vmem:[%s0] sm:$0xf]
  %v15 = vld [vmem:[%s0 + $0x4] sm:$0xf]
  %v16 = vld [vmem:[%s0 + $0x8] sm:$0xf]
  %v17 = vld [vmem:[%s0 + $0xc] sm:$0xf]
  %v18 = vunpack.c.l.bf16 %v14
  %v19 = vunpack.c.l.bf16 %v15
  %v20 = vunpack.c.l.bf16 %v16
  %v21 = vunpack.c.l.bf16 %v17
  %v22 = vld [vmem:[%s1] sm:$0x1]
  %v24 = vlaneseq
  %v25 = vshrl.u32 %v24, 7
  %v26 = vsub.s32 0, %v25
  %v27 = vrot.slane %v22, %v26
  %v29 = vmul.f32 %v18, %v27
  %v30 = vmul.f32 %v19, %v27
  %v31 = vmul.f32 %v20, %v27
  %v32 = vmul.f32 %v21, %v27
  %v33 = vld [vmem:[%s2] sm:$0x1]
  %v35 = vlaneseq
  %v36 = vshrl.u32 %v35, 7
  %v37 = vsub.s32 0, %v36
  %v38 = vrot.slane %v33, %v37
  %v40 = vadd.f32 %v29, %v38
  %v41 = vadd.f32 %v30, %v38
  %v42 = vadd.f32 %v31, %v38
  %v43 = vadd.f32 %v32, %v38
  %v44 = vmax.f32 %v40, 0.0
  %v45 = vmax.f32 %v41, 0.0
  %v46 = vmax.f32 %v42, 0.0
  %v47 = vmax.f32 %v43, 0.0
  %v48 = vpack.c.bf16 %v45, %v44
  %v49 = vpack.c.bf16 %v47, %v46
  %v52 = vunpack.c.l.b16 %v48
  %v53 = vunpack.c.h.b16 %v48
  %v54 = vunpack.c.l.b16 %v49
  %v55 = vunpack.c.h.b16 %v49
  %v56 = vpack.c.b16 %v52, %v52
  %v57 = vpack.c.b16 %v53, %v53
  %v58 = vpack.c.b16 %v54, %v54
  %v59 = vpack.c.b16 %v55, %v55
  %64 = vst [vmem:[%s3] sm:$0xf] %v56
  %65 = vst [vmem:[%s3 + $0x4] sm:$0xf] %v57
  %66 = vst [vmem:[%s3 + $0x8] sm:$0xf] %v58
  %67 = vst [vmem:[%s3 + $0xc] sm:$0xf] %v59
  // Predicated region
  $region14: #{cifar_gen_forward.12} parent=0 // pred_check
    _
  $region15: #{cifar_gen_forward.12} parent=0 // pred_check_branch
    %69 = sbr.rel (0) target = $region17
  $region16: #{cifar_gen_forward.12} parent=0 // pred_region
    _
  $region17: #{cifar_gen_forward.12} parent=0 // pred_fallthru
    _
  // Predicated region
  $region18: #{cifar_gen_forward.12} parent=0 // pred_check
    _
  $region19: #{cifar_gen_forward.12} parent=0 // pred_check_branch
    %71 = sbr.rel (0) target = $region21
  $region20: #{cifar_gen_forward.12} parent=0 // pred_region
    _
  $region21: #{cifar_gen_forward.12} parent=0 // pred_fallthru
    _

// kernel: cifar_gen_forward.11
$region0: #{cifar_gen_forward.11}
  #allocation0 [shape = 'u32[]', space=smem, size = 0x4, offset = 0x4, fixed_abs, tag = 'smem constant byte address 0x4 - core index']
  #allocation1 [shape = 'u32[144,128]{1,0:T(1,128)}', space=vmem, size = 0x12000, scoped, tag = 'internal scratch']
  %s0 = inlined_call_operand.vmem [shape: bf16[32,576], index: 0, kind: input, shape index: {}]
  %s1 = inlined_call_operand.vmem [shape: bf16[576,128], index: 1, kind: input, shape index: {}]
  %s2 = inlined_call_operand.vmem [shape: bf16[32,128], index: 2, kind: output, shape index: {0}]
  %s3 = inlined_call_operand.vmem [shape: f32[1,1,128], index: 3, kind: output, shape index: {1}]
  %s4 = inlined_call_operand.vmem [shape: f32[1,1,128], index: 4, kind: output, shape index: {2}]
  %5 = xla_tuple %s2, %s3, %s4
  %s6 = sld [smem:[#allocation0]]
  $region34: #{cifar_gen_forward.11} parent=0
    _
  %s8 = ssub.s32 1, %s6
  %s9 = scalar_select 0, %s8, %s6
  // Predicated region
  $region2: #{cifar_gen_forward.11} parent=0 // pred_check
    _
  $region3: #{cifar_gen_forward.11} parent=0 // pred_check_branch
    %11 = sbr.rel (0) target = $region5
  $region4: #{cifar_gen_forward.11} parent=0 // pred_region
    _
  $region5: #{cifar_gen_forward.11} parent=0 // pred_fallthru
    _
  // Predicated region
  $region6: #{cifar_gen_forward.11} parent=0 // pred_check
    _
  $region7: #{cifar_gen_forward.11} parent=0 // pred_check_branch
    %13 = sbr.rel (0) target = $region9
  $region8: #{cifar_gen_forward.11} parent=0 // pred_region
    _
  $region9: #{cifar_gen_forward.11} parent=0 // pred_fallthru
    _
  %v15 = vld [vmem:[%s0] sm:$0xff]
  %v16 = vld [vmem:[%s0 + $0x8] sm:$0xff]
  %v17 = vld [vmem:[%s0 + $0x10] sm:$0xf]
  %v18 = vld [vmem:[%s0 + $0x14] sm:$0xff]
  %v19 = vld [vmem:[%s0 + $0x1c] sm:$0xff]
  %v20 = vld [vmem:[%s0 + $0x24] sm:$0xf]
  %v21 = vld [vmem:[%s0 + $0x28] sm:$0xff]
  %v22 = vld [vmem:[%s0 + $0x30] sm:$0xff]
  %v23 = vld [vmem:[%s0 + $0x38] sm:$0xf]
  %v24 = vld [vmem:[%s0 + $0x3c] sm:$0xff]
  %v25 = vld [vmem:[%s0 + $0x44] sm:$0xff]
  %v26 = vld [vmem:[%s0 + $0x4c] sm:$0xf]
  %v27 = vld [vmem:[%s1] sm:$0xf]
  %v28 = vld [vmem:[%s1 + $0x4] sm:$0xf]
  %v29 = vld [vmem:[%s1 + $0x8] sm:$0xf]
  %v30 = vld [vmem:[%s1 + $0xc] sm:$0xf]
  %v31 = vld [vmem:[%s1 + $0x10] sm:$0xf]
  %v32 = vld [vmem:[%s1 + $0x14] sm:$0xf]
  %v33 = vld [vmem:[%s1 + $0x18] sm:$0xf]
  %v34 = vld [vmem:[%s1 + $0x1c] sm:$0xf]
  %v35 = vld [vmem:[%s1 + $0x20] sm:$0xf]
  %v36 = vld [vmem:[%s1 + $0x24] sm:$0xf]
  %v37 = vld [vmem:[%s1 + $0x28] sm:$0xf]
  %v38 = vld [vmem:[%s1 + $0x2c] sm:$0xf]
  %v39 = vld [vmem:[%s1 + $0x30] sm:$0xf]
  %v40 = vld [vmem:[%s1 + $0x34] sm:$0xf]
  %v41 = vld [vmem:[%s1 + $0x38] sm:$0xf]
  %v42 = vld [vmem:[%s1 + $0x3c] sm:$0xf]
  %v43 = vld [vmem:[%s1 + $0x40] sm:$0xf]
  %v44 = vld [vmem:[%s1 + $0x44] sm:$0xf]
  %v45 = vld [vmem:[%s1 + $0x48] sm:$0xf]
  %v46 = vld [vmem:[%s1 + $0x4c] sm:$0xf]
  %v47 = vld [vmem:[%s1 + $0x50] sm:$0xf]
  %v48 = vld [vmem:[%s1 + $0x54] sm:$0xf]
  %v49 = vld [vmem:[%s1 + $0x58] sm:$0xf]
  %v50 = vld [vmem:[%s1 + $0x5c] sm:$0xf]
  %v51 = vld [vmem:[%s1 + $0x60] sm:$0xf]
  %v52 = vld [vmem:[%s1 + $0x64] sm:$0xf]
  %v53 = vld [vmem:[%s1 + $0x68] sm:$0xf]
  %v54 = vld [vmem:[%s1 + $0x6c] sm:$0xf]
  %v55 = vld [vmem:[%s1 + $0x70] sm:$0xf]
  %v56 = vld [vmem:[%s1 + $0x74] sm:$0xf]
  %v57 = vld [vmem:[%s1 + $0x78] sm:$0xf]
  %v58 = vld [vmem:[%s1 + $0x7c] sm:$0xf]
  %v59 = vld [vmem:[%s1 + $0x80] sm:$0xf]
  %v60 = vld [vmem:[%s1 + $0x84] sm:$0xf]
  %v61 = vld [vmem:[%s1 + $0x88] sm:$0xf]
  %v62 = vld [vmem:[%s1 + $0x8c] sm:$0xf]
  %v63 = vld [vmem:[%s1 + $0x90] sm:$0xf]
  %v64 = vld [vmem:[%s1 + $0x94] sm:$0xf]
  %v65 = vld [vmem:[%s1 + $0x98] sm:$0xf]
  %v66 = vld [vmem:[%s1 + $0x9c] sm:$0xf]
  %v67 = vld [vmem:[%s1 + $0xa0] sm:$0xf]
  %v68 = vld [vmem:[%s1 + $0xa4] sm:$0xf]
  %v69 = vld [vmem:[%s1 + $0xa8] sm:$0xf]
  %v70 = vld [vmem:[%s1 + $0xac] sm:$0xf]
  %v71 = vld [vmem:[%s1 + $0xb0] sm:$0xf]
  %v72 = vld [vmem:[%s1 + $0xb4] sm:$0xf]
  %v73 = vld [vmem:[%s1 + $0xb8] sm:$0xf]
  %v74 = vld [vmem:[%s1 + $0xbc] sm:$0xf]
  %v75 = vld [vmem:[%s1 + $0xc0] sm:$0xf]
  %v76 = vld [vmem:[%s1 + $0xc4] sm:$0xf]
  %v77 = vld [vmem:[%s1 + $0xc8] sm:$0xf]
  %v78 = vld [vmem:[%s1 + $0xcc] sm:$0xf]
  %v79 = vld [vmem:[%s1 + $0xd0] sm:$0xf]
  %v80 = vld [vmem:[%s1 + $0xd4] sm:$0xf]
  %v81 = vld [vmem:[%s1 + $0xd8] sm:$0xf]
  %v82 = vld [vmem:[%s1 + $0xdc] sm:$0xf]
  %v83 = vld [vmem:[%s1 + $0xe0] sm:$0xf]
  %v84 = vld [vmem:[%s1 + $0xe4] sm:$0xf]
  %v85 = vld [vmem:[%s1 + $0xe8] sm:$0xf]
  %v86 = vld [vmem:[%s1 + $0xec] sm:$0xf]
  %v87 = vld [vmem:[%s1 + $0xf0] sm:$0xf]
  %v88 = vld [vmem:[%s1 + $0xf4] sm:$0xf]
  %v89 = vld [vmem:[%s1 + $0xf8] sm:$0xf]
  %v90 = vld [vmem:[%s1 + $0xfc] sm:$0xf]
  %v91 = vld [vmem:[%s1 + $0x100] sm:$0xf]
  %v92 = vld [vmem:[%s1 + $0x104] sm:$0xf]
  %v93 = vld [vmem:[%s1 + $0x108] sm:$0xf]
  %v94 = vld [vmem:[%s1 + $0x10c] sm:$0xf]
  %v95 = vld [vmem:[%s1 + $0x110] sm:$0xf]
  %v96 = vld [vmem:[%s1 + $0x114] sm:$0xf]
  %v97 = vld [vmem:[%s1 + $0x118] sm:$0xf]
  %v98 = vld [vmem:[%s1 + $0x11c] sm:$0xf]
  %v111 = vunpack.c.l.b16 %v15
  %v112 = vunpack.c.h.b16 %v15
  %v113 = vunpack.c.l.b16 %v16
  %v114 = vunpack.c.h.b16 %v16
  %v115 = vunpack.c.l.b16 %v17
  %v116 = vunpack.c.l.b16 %v18
  %v117 = vunpack.c.h.b16 %v18
  %v118 = vunpack.c.l.b16 %v19
  %v119 = vunpack.c.h.b16 %v19
  %v120 = vunpack.c.l.b16 %v20
  %v121 = vunpack.c.l.b16 %v21
  %v122 = vunpack.c.h.b16 %v21
  %v123 = vunpack.c.l.b16 %v22
  %v124 = vunpack.c.h.b16 %v22
  %v125 = vunpack.c.l.b16 %v23
  %v126 = vunpack.c.l.b16 %v24
  %v127 = vunpack.c.h.b16 %v24
  %v128 = vunpack.c.l.b16 %v25
  %v129 = vunpack.c.h.b16 %v25
  %v130 = vunpack.c.l.b16 %v26
  %v131 = vpack.c.b16 %v116, %v111
  %v132 = vpack.c.b16 %v117, %v112
  %v133 = vpack.c.b16 %v118, %v113
  %v134 = vpack.c.b16 %v119, %v114
  %v135 = vpack.c.b16 %v120, %v115
  %v136 = vpack.c.b16 %v126, %v121
  %v137 = vpack.c.b16 %v127, %v122
  %v138 = vpack.c.b16 %v128, %v123
  %v139 = vpack.c.b16 %v129, %v124
  %v140 = vpack.c.b16 %v130, %v125
  %v221 = vunpack.c.l.b16 %v27
  %v222 = vunpack.c.l.b16 %v28
  %v223 = vunpack.c.l.b16 %v29
  %v224 = vunpack.c.l.b16 %v30
  %v225 = vunpack.c.l.b16 %v31
  %v226 = vunpack.c.l.b16 %v32
  %v227 = vunpack.c.l.b16 %v33
  %v228 = vunpack.c.l.b16 %v34
  %v229 = vunpack.c.l.b16 %v35
  %v230 = vunpack.c.l.b16 %v36
  %v231 = vunpack.c.l.b16 %v37
  %v232 = vunpack.c.l.b16 %v38
  %v233 = vunpack.c.l.b16 %v39
  %v234 = vunpack.c.l.b16 %v40
  %v235 = vunpack.c.l.b16 %v41
  %v236 = vunpack.c.l.b16 %v42
  %v237 = vunpack.c.l.b16 %v43
  %v238 = vunpack.c.l.b16 %v44
  %v239 = vunpack.c.l.b16 %v45
  %v240 = vunpack.c.l.b16 %v46
  %v241 = vunpack.c.l.b16 %v47
  %v242 = vunpack.c.l.b16 %v48
  %v243 = vunpack.c.l.b16 %v49
  %v244 = vunpack.c.l.b16 %v50
  %v245 = vunpack.c.l.b16 %v51
  %v246 = vunpack.c.l.b16 %v52
  %v247 = vunpack.c.l.b16 %v53
  %v248 = vunpack.c.l.b16 %v54
  %v249 = vunpack.c.l.b16 %v55
  %v250 = vunpack.c.l.b16 %v56
  %v251 = vunpack.c.l.b16 %v57
  %v252 = vunpack.c.l.b16 %v58
  %v253 = vunpack.c.l.b16 %v59
  %v254 = vunpack.c.l.b16 %v60
  %v255 = vunpack.c.l.b16 %v61
  %v256 = vunpack.c.l.b16 %v62
  %v257 = vunpack.c.l.b16 %v63
  %v258 = vunpack.c.l.b16 %v64
  %v259 = vunpack.c.l.b16 %v65
  %v260 = vunpack.c.l.b16 %v66
  %v261 = vunpack.c.l.b16 %v67
  %v262 = vunpack.c.l.b16 %v68
  %v263 = vunpack.c.l.b16 %v69
  %v264 = vunpack.c.l.b16 %v70
  %v265 = vunpack.c.l.b16 %v71
  %v266 = vunpack.c.l.b16 %v72
  %v267 = vunpack.c.l.b16 %v73
  %v268 = vunpack.c.l.b16 %v74
  %v269 = vunpack.c.l.b16 %v75
  %v270 = vunpack.c.l.b16 %v76
  %v271 = vunpack.c.l.b16 %v77
  %v272 = vunpack.c.l.b16 %v78
  %v273 = vunpack.c.l.b16 %v79
  %v274 = vunpack.c.l.b16 %v80
  %v275 = vunpack.c.l.b16 %v81
  %v276 = vunpack.c.l.b16 %v82
  %v277 = vunpack.c.l.b16 %v83
  %v278 = vunpack.c.l.b16 %v84
  %v279 = vunpack.c.l.b16 %v85
  %v280 = vunpack.c.l.b16 %v86
  %v281 = vunpack.c.l.b16 %v87
  %v282 = vunpack.c.l.b16 %v88
  %v283 = vunpack.c.l.b16 %v89
  %v284 = vunpack.c.l.b16 %v90
  %v285 = vunpack.c.l.b16 %v91
  %v286 = vunpack.c.l.b16 %v92
  %v287 = vunpack.c.l.b16 %v93
  %v288 = vunpack.c.l.b16 %v94
  %v289 = vunpack.c.l.b16 %v95
  %v290 = vunpack.c.l.b16 %v96
  %v291 = vunpack.c.l.b16 %v97
  %v292 = vunpack.c.l.b16 %v98
  %v293 = vpack.c.b16 %v222, %v221
  %v294 = vpack.c.b16 %v224, %v223
  %v295 = vpack.c.b16 %v226, %v225
  %v296 = vpack.c.b16 %v228, %v227
  %v297 = vpack.c.b16 %v230, %v229
  %v298 = vpack.c.b16 %v232, %v231
  %v299 = vpack.c.b16 %v234, %v233
  %v300 = vpack.c.b16 %v236, %v235
  %v301 = vpack.c.b16 %v238, %v237
  %v302 = vpack.c.b16 %v240, %v239
  %v303 = vpack.c.b16 %v242, %v241
  %v304 = vpack.c.b16 %v244, %v243
  %v305 = vpack.c.b16 %v246, %v245
  %v306 = vpack.c.b16 %v248, %v247
  %v307 = vpack.c.b16 %v250, %v249
  %v308 = vpack.c.b16 %v252, %v251
  %v309 = vpack.c.b16 %v254, %v253
  %v310 = vpack.c.b16 %v256, %v255
  %v311 = vpack.c.b16 %v258, %v257
  %v312 = vpack.c.b16 %v260, %v259
  %v313 = vpack.c.b16 %v262, %v261
  %v314 = vpack.c.b16 %v264, %v263
  %v315 = vpack.c.b16 %v266, %v265
  %v316 = vpack.c.b16 %v268, %v267
  %v317 = vpack.c.b16 %v270, %v269
  %v318 = vpack.c.b16 %v272, %v271
  %v319 = vpack.c.b16 %v274, %v273
  %v320 = vpack.c.b16 %v276, %v275
  %v321 = vpack.c.b16 %v278, %v277
  %v322 = vpack.c.b16 %v280, %v279
  %v323 = vpack.c.b16 %v282, %v281
  %v324 = vpack.c.b16 %v284, %v283
  %v325 = vpack.c.b16 %v286, %v285
  %v326 = vpack.c.b16 %v288, %v287
  %v327 = vpack.c.b16 %v290, %v289
  %v328 = vpack.c.b16 %v292, %v291
  %vm365 = vcmask 523264
  %v367 = vsel %vm365, %v135, 0
  %v370 = vsel %vm365, %v140, 0
  %372 = vmatprep.subr.bf16.mxu0 0
  %373 = vmatpush1.bf16.msra.mxu0 %v293
  %374 = vmatprep.subr.bf16.mxu0 0
  %375 = vmatpush1.bf16.msra.mxu0 %v294
  %376 = vmatprep.subr.bf16.mxu0 0
  %377 = vmatpush1.bf16.msra.mxu0 %v295
  %378 = vmatprep.subr.bf16.mxu0 0
  %379 = vmatpush1.bf16.msra.mxu0 %v296
  %380 = vmatprep.subr.bf16.mxu0 0
  %381 = vmatpush1.bf16.msra.mxu0 %v297
  %382 = vmatprep.subr.bf16.mxu0 0
  %383 = vmatpush1.bf16.msra.mxu0 %v298
  %384 = vmatprep.subr.bf16.mxu0 0
  %385 = vmatpush1.bf16.msra.mxu0 %v299
  %386 = vmatprep.subr.bf16.mxu0 0
  %387 = vmatpush1.bf16.msra.mxu0 %v300
  %388 = vmatprep.subr.bf16.mxu0 0
  %389 = vmatpush1.bf16.msra.mxu0 %v301
  %390 = vmatprep.subr.bf16.mxu0 0
  %391 = vmatpush1.bf16.msra.mxu0 %v302
  %392 = vmatprep.subr.bf16.mxu0 0
  %393 = vmatpush1.bf16.msra.mxu0 %v303
  %394 = vmatprep.subr.bf16.mxu0 0
  %395 = vmatpush1.bf16.msra.mxu0 %v304
  %396 = vmatprep.subr.bf16.mxu0 0
  %397 = vmatpush1.bf16.msra.mxu0 %v305
  %398 = vmatprep.subr.bf16.mxu0 0
  %399 = vmatpush1.bf16.msra.mxu0 %v306
  %400 = vmatprep.subr.bf16.mxu0 0
  %401 = vmatpush1.bf16.msra.mxu0 %v307
  %402 = vmatprep.subr.bf16.mxu0 0
  %403 = vmatpush1.bf16.msra.mxu0 %v308
  %404 = vmatprep.mubr.bf16.mxu0 %v132
  %405 = vmatmul.mubr.bf16.gmra.mrb[0].mxu0 %v131
  %v406 = vpop.f32.mrb[0].mxu0
  %v407 = vadd.f32 0.0, %v406
  %v408 = vpop.f32.mrb[0].mxu0
  %v409 = vpop.f32.mrb[0].mxu0
  %v410 = vadd.f32 0.0, %v409
  %v411 = vpop.f32.mrb[0].mxu0
  %412 = vmatprep.mubr.bf16.mxu0 %v137
  %413 = vmatmul.mubr.bf16.gmra.mrb[0].mxu0 %v136
  %v414 = vpop.f32.mrb[0].mxu0
  %v415 = vadd.f32 0.0, %v414
  %v416 = vpop.f32.mrb[0].mxu0
  %v417 = vpop.f32.mrb[0].mxu0
  %v418 = vadd.f32 0.0, %v417
  %v419 = vpop.f32.mrb[0].mxu0
  %420 = vdwg.mxu0
  %421 = vmatprep.subr.bf16.mxu0 0
  %422 = vmatpush1.bf16.msra.mxu0 %v309
  %423 = vmatprep.subr.bf16.mxu0 0
  %424 = vmatpush1.bf16.msra.mxu0 %v310
  %425 = vmatprep.subr.bf16.mxu0 0
  %426 = vmatpush1.bf16.msra.mxu0 %v311
  %427 = vmatprep.subr.bf16.mxu0 0
  %428 = vmatpush1.bf16.msra.mxu0 %v312
  %429 = vmatprep.subr.bf16.mxu0 0
  %430 = vmatpush1.bf16.msra.mxu0 %v313
  %431 = vmatprep.subr.bf16.mxu0 0
  %432 = vmatpush1.bf16.msra.mxu0 %v314
  %433 = vmatprep.subr.bf16.mxu0 0
  %434 = vmatpush1.bf16.msra.mxu0 %v315
  %435 = vmatprep.subr.bf16.mxu0 0
  %436 = vmatpush1.bf16.msra.mxu0 %v316
  %437 = vmatprep.subr.bf16.mxu0 0
  %438 = vmatpush1.bf16.msra.mxu0 %v317
  %439 = vmatprep.subr.bf16.mxu0 0
  %440 = vmatpush1.bf16.msra.mxu0 %v318
  %441 = vmatprep.subr.bf16.mxu0 0
  %442 = vmatpush1.bf16.msra.mxu0 %v319
  %443 = vmatprep.subr.bf16.mxu0 0
  %444 = vmatpush1.bf16.msra.mxu0 %v320
  %445 = vmatprep.subr.bf16.mxu0 0
  %446 = vmatpush1.bf16.msra.mxu0 %v321
  %447 = vmatprep.subr.bf16.mxu0 0
  %448 = vmatpush1.bf16.msra.mxu0 %v322
  %449 = vmatprep.subr.bf16.mxu0 0
  %450 = vmatpush1.bf16.msra.mxu0 %v323
  %451 = vmatprep.subr.bf16.mxu0 0
  %452 = vmatpush1.bf16.msra.mxu0 %v324
  %453 = vmatprep.mubr.bf16.mxu0 %v134
  %454 = vmatmul.mubr.bf16.gmra.mrb[0].mxu0 %v133
  %v455 = vpop.f32.mrb[0].mxu0
  %v456 = vadd.f32 %v407, %v455
  %v457 = vpop.f32.mrb[0].mxu0
  %v458 = vpop.f32.mrb[0].mxu0
  %v459 = vadd.f32 %v410, %v458
  %v460 = vpop.f32.mrb[0].mxu0
  %461 = vmatprep.mubr.bf16.mxu0 %v139
  %462 = vmatmul.mubr.bf16.gmra.mrb[0].mxu0 %v138
  %v463 = vpop.f32.mrb[0].mxu0
  %v464 = vadd.f32 %v415, %v463
  %v465 = vpop.f32.mrb[0].mxu0
  %v466 = vpop.f32.mrb[0].mxu0
  %v467 = vadd.f32 %v418, %v466
  %v468 = vpop.f32.mrb[0].mxu0
  %469 = vdwg.mxu0
  %470 = vmatprep.subr.bf16.mxu0 0
  %471 = vmatpush1.bf16.msra.mxu0 %v325
  %472 = vmatprep.subr.bf16.mxu0 0
  %473 = vmatpush1.bf16.msra.mxu0 %v326
  %474 = vmatprep.subr.bf16.mxu0 0
  %475 = vmatpush1.bf16.msra.mxu0 %v327
  %476 = vmatprep.subr.bf16.mxu0 0
  %477 = vmatpush1.bf16.msra.mxu0 %v328
  %478 = vmatprep.subr.bf16.mxu0 0
  %479 = vmatpush1.bf16.msra.mxu0 0
  %480 = vmatprep.subr.bf16.mxu0 0
  %481 = vmatpush1.bf16.msra.mxu0 0
  %482 = vmatprep.subr.bf16.mxu0 0
  %483 = vmatpush1.bf16.msra.mxu0 0
  %484 = vmatprep.subr.bf16.mxu0 0
  %485 = vmatpush1.bf16.msra.mxu0 0
  %486 = vmatprep.subr.bf16.mxu0 0
  %487 = vmatpush1.bf16.msra.mxu0 0
  %488 = vmatprep.subr.bf16.mxu0 0
  %489 = vmatpush1.bf16.msra.mxu0 0
  %490 = vmatprep.subr.bf16.mxu0 0
  %491 = vmatpush1.bf16.msra.mxu0 0
  %492 = vmatprep.subr.bf16.mxu0 0
  %493 = vmatpush1.bf16.msra.mxu0 0
  %494 = vmatprep.subr.bf16.mxu0 0
  %495 = vmatpush1.bf16.msra.mxu0 0
  %496 = vmatprep.subr.bf16.mxu0 0
  %497 = vmatpush1.bf16.msra.mxu0 0
  %498 = vmatprep.subr.bf16.mxu0 0
  %499 = vmatpush1.bf16.msra.mxu0 0
  %500 = vmatprep.subr.bf16.mxu0 0
  %501 = vmatpush1.bf16.msra.mxu0 0
  %502 = vmatprep.mubr.bf16.mxu0 0
  %503 = vmatmul.mubr.bf16.gmra.mrb[0].mxu0 %v367
  %v504 = vpop.f32.mrb[0].mxu0
  %v505 = vadd.f32 %v456, %v504
  %v506 = vpop.f32.mrb[0].mxu0
  %v507 = vpop.f32.mrb[0].mxu0
  %v508 = vadd.f32 %v459, %v507
  %v509 = vpop.f32.mrb[0].mxu0
  %510 = vmatprep.mubr.bf16.mxu0 0
  %511 = vmatmul.mubr.bf16.gmra.mrb[0].mxu0 %v370
  %v512 = vpop.f32.mrb[0].mxu0
  %v513 = vadd.f32 %v464, %v512
  %v514 = vpop.f32.mrb[0].mxu0
  %v515 = vpop.f32.mrb[0].mxu0
  %v516 = vadd.f32 %v467, %v515
  %v517 = vpop.f32.mrb[0].mxu0
  %518 = vdwg.mxu0
  %v519 = vpack.c.bf16 %v508, %v505
  %v520 = vpack.c.bf16 %v516, %v513
  %v523 = vunpack.c.l.b16 %v519
  %v524 = vunpack.c.h.b16 %v519
  %v525 = vunpack.c.l.b16 %v520
  %v526 = vunpack.c.h.b16 %v520
  %v527 = vpack.c.b16 %v523, %v523
  %v528 = vpack.c.b16 %v524, %v524
  %v529 = vpack.c.b16 %v525, %v525
  %v530 = vpack.c.b16 %v526, %v526
  %535 = vst [vmem:[%s2] sm:$0xf] %v527
  %536 = vst [vmem:[%s2 + $0x4] sm:$0xf] %v528
  %537 = vst [vmem:[%s2 + $0x8] sm:$0xf] %v529
  %538 = vst [vmem:[%s2 + $0xc] sm:$0xf] %v530
  %v539 = vadd.f32 %v505, %v508
  %v540 = vadd.f32 %v539, %v513
  %v541 = vadd.f32 %v540, %v516
  %v542 = vrot.slane %v541, 4
  %v543 = vadd.f32 %v541, %v542
  %v544 = vrot.slane %v543, 2
  %v545 = vadd.f32 %v543, %v544
  %v546 = vrot.slane %v545, 1
  %v547 = vadd.f32 %v545, %v546
  %v548 = vmul.f32 %v505, %v505
  %v549 = vmul.f32 %v508, %v508
  %v550 = vmul.f32 %v513, %v513
  %v551 = vmul.f32 %v516, %v516
  %v552 = vadd.f32 %v548, %v549
  %v553 = vadd.f32 %v552, %v550
  %v554 = vadd.f32 %v553, %v551
  %v555 = vrot.slane %v554, 4
  %v556 = vadd.f32 %v554, %v555
  %v557 = vrot.slane %v556, 2
  %v558 = vadd.f32 %v556, %v557
  %v559 = vrot.slane %v558, 1
  %v560 = vadd.f32 %v558, %v559
  %561 = vst [vmem:[%s3] sm:$0x1] %v547
  %562 = vst [vmem:[%s4] sm:$0x1] %v560
  // Predicated region
  $region10: #{cifar_gen_forward.11} parent=0 // pred_check
    _
  $region11: #{cifar_gen_forward.11} parent=0 // pred_check_branch
    %564 = sbr.rel (0) target = $region13
  $region12: #{cifar_gen_forward.11} parent=0 // pred_region
    _
  $region13: #{cifar_gen_forward.11} parent=0 // pred_fallthru
    _
  // Predicated region
  $region14: #{cifar_gen_forward.11} parent=0 // pred_check
    _
  $region15: #{cifar_gen_forward.11} parent=0 // pred_check_branch
    %566 = sbr.rel (0) target = $region17
  $region16: #{cifar_gen_forward.11} parent=0 // pred_region
    _
  $region17: #{cifar_gen_forward.11} parent=0 // pred_fallthru
    _
  // Predicated region
  $region18: #{cifar_gen_forward.11} parent=0 // pred_check
    _
  $region19: #{cifar_gen_forward.11} parent=0 // pred_check_branch
    %568 = sbr.rel (0) target = $region21
  $region20: #{cifar_gen_forward.11} parent=0 // pred_region
    _
  $region21: #{cifar_gen_forward.11} parent=0 // pred_fallthru
    _
  // Predicated region
  $region22: #{cifar_gen_forward.11} parent=0 // pred_check
    _
  $region23: #{cifar_gen_forward.11} parent=0 // pred_check_branch
    %570 = sbr.rel (0) target = $region25
  $region24: #{cifar_gen_forward.11} parent=0 // pred_region
    _
  $region25: #{cifar_gen_forward.11} parent=0 // pred_fallthru
    _
  // Predicated region
  $region26: #{cifar_gen_forward.11} parent=0 // pred_check
    _
  $region27: #{cifar_gen_forward.11} parent=0 // pred_check_branch
    %572 = sbr.rel (0) target = $region29
  $region28: #{cifar_gen_forward.11} parent=0 // pred_region
    _
  $region29: #{cifar_gen_forward.11} parent=0 // pred_fallthru
    _
  // Predicated region
  $region30: #{cifar_gen_forward.11} parent=0 // pred_check
    _
  $region31: #{cifar_gen_forward.11} parent=0 // pred_check_branch
    %574 = sbr.rel (0) target = $region33
  $region32: #{cifar_gen_forward.11} parent=0 // pred_region
    _
  $region33: #{cifar_gen_forward.11} parent=0 // pred_fallthru
    _

// kernel: cifar_gen_forward.13
$region0: #{cifar_gen_forward.13}
  #allocation0 [shape = 'u32[]', space=smem, size = 0x4, offset = 0x4, fixed_abs, tag = 'smem constant byte address 0x4 - core index']
  #allocation1 [shape = 'u32[144,128]{1,0:T(1,128)}', space=vmem, size = 0x12000, scoped, tag = 'internal scratch']
  %s0 = inlined_call_operand.vmem [shape: bf16[64,576], index: 0, kind: input, shape index: {}]
  %s1 = inlined_call_operand.vmem [shape: bf16[576,128], index: 1, kind: input, shape index: {}]
  %s2 = inlined_call_operand.vmem [shape: bf16[64,128], index: 2, kind: output, shape index: {}]
  %s3 = sld [smem:[#allocation0]]
  $region18: #{cifar_gen_forward.13} parent=0
    _
  %s5 = ssub.s32 1, %s3
  %s6 = scalar_select 0, %s5, %s3
  // Predicated region
  $region2: #{cifar_gen_forward.13} parent=0 // pred_check
    _
  $region3: #{cifar_gen_forward.13} parent=0 // pred_check_branch
    %8 = sbr.rel (0) target = $region5
  $region4: #{cifar_gen_forward.13} parent=0 // pred_region
    _
  $region5: #{cifar_gen_forward.13} parent=0 // pred_fallthru
    _
  // Predicated region
  $region6: #{cifar_gen_forward.13} parent=0 // pred_check
    _
  $region7: #{cifar_gen_forward.13} parent=0 // pred_check_branch
    %10 = sbr.rel (0) target = $region9
  $region8: #{cifar_gen_forward.13} parent=0 // pred_region
    _
  $region9: #{cifar_gen_forward.13} parent=0 // pred_fallthru
    _
  %v12 = vld [vmem:[%s0] sm:$0xff]
  %v13 = vld [vmem:[%s0 + $0x8] sm:$0xff]
  %v14 = vld [vmem:[%s0 + $0x10] sm:$0xf]
  %v15 = vld [vmem:[%s0 + $0x14] sm:$0xff]
  %v16 = vld [vmem:[%s0 + $0x1c] sm:$0xff]
  %v17 = vld [vmem:[%s0 + $0x24] sm:$0xf]
  %v18 = vld [vmem:[%s0 + $0x28] sm:$0xff]
  %v19 = vld [vmem:[%s0 + $0x30] sm:$0xff]
  %v20 = vld [vmem:[%s0 + $0x38] sm:$0xf]
  %v21 = vld [vmem:[%s0 + $0x3c] sm:$0xff]
  %v22 = vld [vmem:[%s0 + $0x44] sm:$0xff]
  %v23 = vld [vmem:[%s0 + $0x4c] sm:$0xf]
  %v24 = vld [vmem:[%s0 + $0x50] sm:$0xff]
  %v25 = vld [vmem:[%s0 + $0x58] sm:$0xff]
  %v26 = vld [vmem:[%s0 + $0x60] sm:$0xf]
  %v27 = vld [vmem:[%s0 + $0x64] sm:$0xff]
  %v28 = vld [vmem:[%s0 + $0x6c] sm:$0xff]
  %v29 = vld [vmem:[%s0 + $0x74] sm:$0xf]
  %v30 = vld [vmem:[%s0 + $0x78] sm:$0xff]
  %v31 = vld [vmem:[%s0 + $0x80] sm:$0xff]
  %v32 = vld [vmem:[%s0 + $0x88] sm:$0xf]
  %v33 = vld [vmem:[%s0 + $0x8c] sm:$0xff]
  %v34 = vld [vmem:[%s0 + $0x94] sm:$0xff]
  %v35 = vld [vmem:[%s0 + $0x9c] sm:$0xf]
  %v36 = vld [vmem:[%s1] sm:$0xf]
  %v37 = vld [vmem:[%s1 + $0x4] sm:$0xf]
  %v38 = vld [vmem:[%s1 + $0x8] sm:$0xf]
  %v39 = vld [vmem:[%s1 + $0xc] sm:$0xf]
  %v40 = vld [vmem:[%s1 + $0x10] sm:$0xf]
  %v41 = vld [vmem:[%s1 + $0x14] sm:$0xf]
  %v42 = vld [vmem:[%s1 + $0x18] sm:$0xf]
  %v43 = vld [vmem:[%s1 + $0x1c] sm:$0xf]
  %v44 = vld [vmem:[%s1 + $0x20] sm:$0xf]
  %v45 = vld [vmem:[%s1 + $0x24] sm:$0xf]
  %v46 = vld [vmem:[%s1 + $0x28] sm:$0xf]
  %v47 = vld [vmem:[%s1 + $0x2c] sm:$0xf]
  %v48 = vld [vmem:[%s1 + $0x30] sm:$0xf]
  %v49 = vld [vmem:[%s1 + $0x34] sm:$0xf]
  %v50 = vld [vmem:[%s1 + $0x38] sm:$0xf]
  %v51 = vld [vmem:[%s1 + $0x3c] sm:$0xf]
  %v52 = vld [vmem:[%s1 + $0x40] sm:$0xf]
  %v53 = vld [vmem:[%s1 + $0x44] sm:$0xf]
  %v54 = vld [vmem:[%s1 + $0x48] sm:$0xf]
  %v55 = vld [vmem:[%s1 + $0x4c] sm:$0xf]
  %v56 = vld [vmem:[%s1 + $0x50] sm:$0xf]
  %v57 = vld [vmem:[%s1 + $0x54] sm:$0xf]
  %v58 = vld [vmem:[%s1 + $0x58] sm:$0xf]
  %v59 = vld [vmem:[%s1 + $0x5c] sm:$0xf]
  %v60 = vld [vmem:[%s1 + $0x60] sm:$0xf]
  %v61 = vld [vmem:[%s1 + $0x64] sm:$0xf]
  %v62 = vld [vmem:[%s1 + $0x68] sm:$0xf]
  %v63 = vld [vmem:[%s1 + $0x6c] sm:$0xf]
  %v64 = vld [vmem:[%s1 + $0x70] sm:$0xf]
  %v65 = vld [vmem:[%s1 + $0x74] sm:$0xf]
  %v66 = vld [vmem:[%s1 + $0x78] sm:$0xf]
  %v67 = vld [vmem:[%s1 + $0x7c] sm:$0xf]
  %v68 = vld [vmem:[%s1 + $0x80] sm:$0xf]
  %v69 = vld [vmem:[%s1 + $0x84] sm:$0xf]
  %v70 = vld [vmem:[%s1 + $0x88] sm:$0xf]
  %v71 = vld [vmem:[%s1 + $0x8c] sm:$0xf]
  %v72 = vld [vmem:[%s1 + $0x90] sm:$0xf]
  %v73 = vld [vmem:[%s1 + $0x94] sm:$0xf]
  %v74 = vld [vmem:[%s1 + $0x98] sm:$0xf]
  %v75 = vld [vmem:[%s1 + $0x9c] sm:$0xf]
  %v76 = vld [vmem:[%s1 + $0xa0] sm:$0xf]
  %v77 = vld [vmem:[%s1 + $0xa4] sm:$0xf]
  %v78 = vld [vmem:[%s1 + $0xa8] sm:$0xf]
  %v79 = vld [vmem:[%s1 + $0xac] sm:$0xf]
  %v80 = vld [vmem:[%s1 + $0xb0] sm:$0xf]
  %v81 = vld [vmem:[%s1 + $0xb4] sm:$0xf]
  %v82 = vld [vmem:[%s1 + $0xb8] sm:$0xf]
  %v83 = vld [vmem:[%s1 + $0xbc] sm:$0xf]
  %v84 = vld [vmem:[%s1 + $0xc0] sm:$0xf]
  %v85 = vld [vmem:[%s1 + $0xc4] sm:$0xf]
  %v86 = vld [vmem:[%s1 + $0xc8] sm:$0xf]
  %v87 = vld [vmem:[%s1 + $0xcc] sm:$0xf]
  %v88 = vld [vmem:[%s1 + $0xd0] sm:$0xf]
  %v89 = vld [vmem:[%s1 + $0xd4] sm:$0xf]
  %v90 = vld [vmem:[%s1 + $0xd8] sm:$0xf]
  %v91 = vld [vmem:[%s1 + $0xdc] sm:$0xf]
  %v92 = vld [vmem:[%s1 + $0xe0] sm:$0xf]
  %v93 = vld [vmem:[%s1 + $0xe4] sm:$0xf]
  %v94 = vld [vmem:[%s1 + $0xe8] sm:$0xf]
  %v95 = vld [vmem:[%s1 + $0xec] sm:$0xf]
  %v96 = vld [vmem:[%s1 + $0xf0] sm:$0xf]
  %v97 = vld [vmem:[%s1 + $0xf4] sm:$0xf]
  %v98 = vld [vmem:[%s1 + $0xf8] sm:$0xf]
  %v99 = vld [vmem:[%s1 + $0xfc] sm:$0xf]
  %v100 = vld [vmem:[%s1 + $0x100] sm:$0xf]
  %v101 = vld [vmem:[%s1 + $0x104] sm:$0xf]
  %v102 = vld [vmem:[%s1 + $0x108] sm:$0xf]
  %v103 = vld [vmem:[%s1 + $0x10c] sm:$0xf]
  %v104 = vld [vmem:[%s1 + $0x110] sm:$0xf]
  %v105 = vld [vmem:[%s1 + $0x114] sm:$0xf]
  %v106 = vld [vmem:[%s1 + $0x118] sm:$0xf]
  %v107 = vld [vmem:[%s1 + $0x11c] sm:$0xf]
  %v132 = vunpack.c.l.b16 %v12
  %v133 = vunpack.c.h.b16 %v12
  %v134 = vunpack.c.l.b16 %v13
  %v135 = vunpack.c.h.b16 %v13
  %v136 = vunpack.c.l.b16 %v14
  %v137 = vunpack.c.l.b16 %v15
  %v138 = vunpack.c.h.b16 %v15
  %v139 = vunpack.c.l.b16 %v16
  %v140 = vunpack.c.h.b16 %v16
  %v141 = vunpack.c.l.b16 %v17
  %v142 = vunpack.c.l.b16 %v18
  %v143 = vunpack.c.h.b16 %v18
  %v144 = vunpack.c.l.b16 %v19
  %v145 = vunpack.c.h.b16 %v19
  %v146 = vunpack.c.l.b16 %v20
  %v147 = vunpack.c.l.b16 %v21
  %v148 = vunpack.c.h.b16 %v21
  %v149 = vunpack.c.l.b16 %v22
  %v150 = vunpack.c.h.b16 %v22
  %v151 = vunpack.c.l.b16 %v23
  %v152 = vunpack.c.l.b16 %v24
  %v153 = vunpack.c.h.b16 %v24
  %v154 = vunpack.c.l.b16 %v25
  %v155 = vunpack.c.h.b16 %v25
  %v156 = vunpack.c.l.b16 %v26
  %v157 = vunpack.c.l.b16 %v27
  %v158 = vunpack.c.h.b16 %v27
  %v159 = vunpack.c.l.b16 %v28
  %v160 = vunpack.c.h.b16 %v28
  %v161 = vunpack.c.l.b16 %v29
  %v162 = vunpack.c.l.b16 %v30
  %v163 = vunpack.c.h.b16 %v30
  %v164 = vunpack.c.l.b16 %v31
  %v165 = vunpack.c.h.b16 %v31
  %v166 = vunpack.c.l.b16 %v32
  %v167 = vunpack.c.l.b16 %v33
  %v168 = vunpack.c.h.b16 %v33
  %v169 = vunpack.c.l.b16 %v34
  %v170 = vunpack.c.h.b16 %v34
  %v171 = vunpack.c.l.b16 %v35
  %v172 = vpack.c.b16 %v137, %v132
  %v173 = vpack.c.b16 %v138, %v133
  %v174 = vpack.c.b16 %v139, %v134
  %v175 = vpack.c.b16 %v140, %v135
  %v176 = vpack.c.b16 %v141, %v136
  %v177 = vpack.c.b16 %v147, %v142
  %v178 = vpack.c.b16 %v148, %v143
  %v179 = vpack.c.b16 %v149, %v144
  %v180 = vpack.c.b16 %v150, %v145
  %v181 = vpack.c.b16 %v151, %v146
  %v182 = vpack.c.b16 %v157, %v152
  %v183 = vpack.c.b16 %v158, %v153
  %v184 = vpack.c.b16 %v159, %v154
  %v185 = vpack.c.b16 %v160, %v155
  %v186 = vpack.c.b16 %v161, %v156
  %v187 = vpack.c.b16 %v167, %v162
  %v188 = vpack.c.b16 %v168, %v163
  %v189 = vpack.c.b16 %v169, %v164
  %v190 = vpack.c.b16 %v170, %v165
  %v191 = vpack.c.b16 %v171, %v166
  %v280 = vunpack.c.l.b16 %v36
  %v281 = vunpack.c.l.b16 %v37
  %v282 = vunpack.c.l.b16 %v38
  %v283 = vunpack.c.l.b16 %v39
  %v284 = vunpack.c.l.b16 %v40
  %v285 = vunpack.c.l.b16 %v41
  %v286 = vunpack.c.l.b16 %v42
  %v287 = vunpack.c.l.b16 %v43
  %v288 = vunpack.c.l.b16 %v44
  %v289 = vunpack.c.l.b16 %v45
  %v290 = vunpack.c.l.b16 %v46
  %v291 = vunpack.c.l.b16 %v47
  %v292 = vunpack.c.l.b16 %v48
  %v293 = vunpack.c.l.b16 %v49
  %v294 = vunpack.c.l.b16 %v50
  %v295 = vunpack.c.l.b16 %v51
  %v296 = vunpack.c.l.b16 %v52
  %v297 = vunpack.c.l.b16 %v53
  %v298 = vunpack.c.l.b16 %v54
  %v299 = vunpack.c.l.b16 %v55
  %v300 = vunpack.c.l.b16 %v56
  %v301 = vunpack.c.l.b16 %v57
  %v302 = vunpack.c.l.b16 %v58
  %v303 = vunpack.c.l.b16 %v59
  %v304 = vunpack.c.l.b16 %v60
  %v305 = vunpack.c.l.b16 %v61
  %v306 = vunpack.c.l.b16 %v62
  %v307 = vunpack.c.l.b16 %v63
  %v308 = vunpack.c.l.b16 %v64
  %v309 = vunpack.c.l.b16 %v65
  %v310 = vunpack.c.l.b16 %v66
  %v311 = vunpack.c.l.b16 %v67
  %v312 = vunpack.c.l.b16 %v68
  %v313 = vunpack.c.l.b16 %v69
  %v314 = vunpack.c.l.b16 %v70
  %v315 = vunpack.c.l.b16 %v71
  %v316 = vunpack.c.l.b16 %v72
  %v317 = vunpack.c.l.b16 %v73
  %v318 = vunpack.c.l.b16 %v74
  %v319 = vunpack.c.l.b16 %v75
  %v320 = vunpack.c.l.b16 %v76
  %v321 = vunpack.c.l.b16 %v77
  %v322 = vunpack.c.l.b16 %v78
  %v323 = vunpack.c.l.b16 %v79
  %v324 = vunpack.c.l.b16 %v80
  %v325 = vunpack.c.l.b16 %v81
  %v326 = vunpack.c.l.b16 %v82
  %v327 = vunpack.c.l.b16 %v83
  %v328 = vunpack.c.l.b16 %v84
  %v329 = vunpack.c.l.b16 %v85
  %v330 = vunpack.c.l.b16 %v86
  %v331 = vunpack.c.l.b16 %v87
  %v332 = vunpack.c.l.b16 %v88
  %v333 = vunpack.c.l.b16 %v89
  %v334 = vunpack.c.l.b16 %v90
  %v335 = vunpack.c.l.b16 %v91
  %v336 = vunpack.c.l.b16 %v92
  %v337 = vunpack.c.l.b16 %v93
  %v338 = vunpack.c.l.b16 %v94
  %v339 = vunpack.c.l.b16 %v95
  %v340 = vunpack.c.l.b16 %v96
  %v341 = vunpack.c.l.b16 %v97
  %v342 = vunpack.c.l.b16 %v98
  %v343 = vunpack.c.l.b16 %v99
  %v344 = vunpack.c.l.b16 %v100
  %v345 = vunpack.c.l.b16 %v101
  %v346 = vunpack.c.l.b16 %v102
  %v347 = vunpack.c.l.b16 %v103
  %v348 = vunpack.c.l.b16 %v104
  %v349 = vunpack.c.l.b16 %v105
  %v350 = vunpack.c.l.b16 %v106
  %v351 = vunpack.c.l.b16 %v107
  %v352 = vpack.c.b16 %v281, %v280
  %v353 = vpack.c.b16 %v283, %v282
  %v354 = vpack.c.b16 %v285, %v284
  %v355 = vpack.c.b16 %v287, %v286
  %v356 = vpack.c.b16 %v289, %v288
  %v357 = vpack.c.b16 %v291, %v290
  %v358 = vpack.c.b16 %v293, %v292
  %v359 = vpack.c.b16 %v295, %v294
  %v360 = vpack.c.b16 %v297, %v296
  %v361 = vpack.c.b16 %v299, %v298
  %v362 = vpack.c.b16 %v301, %v300
  %v363 = vpack.c.b16 %v303, %v302
  %v364 = vpack.c.b16 %v305, %v304
  %v365 = vpack.c.b16 %v307, %v306
  %v366 = vpack.c.b16 %v309, %v308
  %v367 = vpack.c.b16 %v311, %v310
  %v368 = vpack.c.b16 %v313, %v312
  %v369 = vpack.c.b16 %v315, %v314
  %v370 = vpack.c.b16 %v317, %v316
  %v371 = vpack.c.b16 %v319, %v318
  %v372 = vpack.c.b16 %v321, %v320
  %v373 = vpack.c.b16 %v323, %v322
  %v374 = vpack.c.b16 %v325, %v324
  %v375 = vpack.c.b16 %v327, %v326
  %v376 = vpack.c.b16 %v329, %v328
  %v377 = vpack.c.b16 %v331, %v330
  %v378 = vpack.c.b16 %v333, %v332
  %v379 = vpack.c.b16 %v335, %v334
  %v380 = vpack.c.b16 %v337, %v336
  %v381 = vpack.c.b16 %v339, %v338
  %v382 = vpack.c.b16 %v341, %v340
  %v383 = vpack.c.b16 %v343, %v342
  %v384 = vpack.c.b16 %v345, %v344
  %v385 = vpack.c.b16 %v347, %v346
  %v386 = vpack.c.b16 %v349, %v348
  %v387 = vpack.c.b16 %v351, %v350
  %vm424 = vcmask 523264
  %v426 = vsel %vm424, %v176, 0
  %v429 = vsel %vm424, %v181, 0
  %v432 = vsel %vm424, %v186, 0
  %v435 = vsel %vm424, %v191, 0
  %437 = vmatprep.subr.bf16.mxu0 0
  %438 = vmatpush1.bf16.msra.mxu0 %v352
  %439 = vmatprep.subr.bf16.mxu0 0
  %440 = vmatpush1.bf16.msra.mxu0 %v353
  %441 = vmatprep.subr.bf16.mxu0 0
  %442 = vmatpush1.bf16.msra.mxu0 %v354
  %443 = vmatprep.subr.bf16.mxu0 0
  %444 = vmatpush1.bf16.msra.mxu0 %v355
  %445 = vmatprep.subr.bf16.mxu0 0
  %446 = vmatpush1.bf16.msra.mxu0 %v356
  %447 = vmatprep.subr.bf16.mxu0 0
  %448 = vmatpush1.bf16.msra.mxu0 %v357
  %449 = vmatprep.subr.bf16.mxu0 0
  %450 = vmatpush1.bf16.msra.mxu0 %v358
  %451 = vmatprep.subr.bf16.mxu0 0
  %452 = vmatpush1.bf16.msra.mxu0 %v359
  %453 = vmatprep.subr.bf16.mxu0 0
  %454 = vmatpush1.bf16.msra.mxu0 %v360
  %455 = vmatprep.subr.bf16.mxu0 0
  %456 = vmatpush1.bf16.msra.mxu0 %v361
  %457 = vmatprep.subr.bf16.mxu0 0
  %458 = vmatpush1.bf16.msra.mxu0 %v362
  %459 = vmatprep.subr.bf16.mxu0 0
  %460 = vmatpush1.bf16.msra.mxu0 %v363
  %461 = vmatprep.subr.bf16.mxu0 0
  %462 = vmatpush1.bf16.msra.mxu0 %v364
  %463 = vmatprep.subr.bf16.mxu0 0
  %464 = vmatpush1.bf16.msra.mxu0 %v365
  %465 = vmatprep.subr.bf16.mxu0 0
  %466 = vmatpush1.bf16.msra.mxu0 %v366
  %467 = vmatprep.subr.bf16.mxu0 0
  %468 = vmatpush1.bf16.msra.mxu0 %v367
  %469 = vmatprep.mubr.bf16.mxu0 %v173
  %470 = vmatmul.mubr.bf16.gmra.mrb[0].mxu0 %v172
  %v471 = vpop.f32.mrb[0].mxu0
  %v472 = vadd.f32 0.0, %v471
  %v473 = vpop.f32.mrb[0].mxu0
  %v474 = vpop.f32.mrb[0].mxu0
  %v475 = vadd.f32 0.0, %v474
  %v476 = vpop.f32.mrb[0].mxu0
  %477 = vmatprep.mubr.bf16.mxu0 %v178
  %478 = vmatmul.mubr.bf16.gmra.mrb[0].mxu0 %v177
  %v479 = vpop.f32.mrb[0].mxu0
  %v480 = vadd.f32 0.0, %v479
  %v481 = vpop.f32.mrb[0].mxu0
  %v482 = vpop.f32.mrb[0].mxu0
  %v483 = vadd.f32 0.0, %v482
  %v484 = vpop.f32.mrb[0].mxu0
  %485 = vmatprep.mubr.bf16.mxu0 %v183
  %486 = vmatmul.mubr.bf16.gmra.mrb[0].mxu0 %v182
  %v487 = vpop.f32.mrb[0].mxu0
  %v488 = vadd.f32 0.0, %v487
  %v489 = vpop.f32.mrb[0].mxu0
  %v490 = vpop.f32.mrb[0].mxu0
  %v491 = vadd.f32 0.0, %v490
  %v492 = vpop.f32.mrb[0].mxu0
  %493 = vmatprep.mubr.bf16.mxu0 %v188
  %494 = vmatmul.mubr.bf16.gmra.mrb[0].mxu0 %v187
  %v495 = vpop.f32.mrb[0].mxu0
  %v496 = vadd.f32 0.0, %v495
  %v497 = vpop.f32.mrb[0].mxu0
  %v498 = vpop.f32.mrb[0].mxu0
  %v499 = vadd.f32 0.0, %v498
  %v500 = vpop.f32.mrb[0].mxu0
  %501 = vdwg.mxu0
  %502 = vmatprep.subr.bf16.mxu0 0
  %503 = vmatpush1.bf16.msra.mxu0 %v368
  %504 = vmatprep.subr.bf16.mxu0 0
  %505 = vmatpush1.bf16.msra.mxu0 %v369
  %506 = vmatprep.subr.bf16.mxu0 0
  %507 = vmatpush1.bf16.msra.mxu0 %v370
  %508 = vmatprep.subr.bf16.mxu0 0
  %509 = vmatpush1.bf16.msra.mxu0 %v371
  %510 = vmatprep.subr.bf16.mxu0 0
  %511 = vmatpush1.bf16.msra.mxu0 %v372
  %512 = vmatprep.subr.bf16.mxu0 0
  %513 = vmatpush1.bf16.msra.mxu0 %v373
  %514 = vmatprep.subr.bf16.mxu0 0
  %515 = vmatpush1.bf16.msra.mxu0 %v374
  %516 = vmatprep.subr.bf16.mxu0 0
  %517 = vmatpush1.bf16.msra.mxu0 %v375
  %518 = vmatprep.subr.bf16.mxu0 0
  %519 = vmatpush1.bf16.msra.mxu0 %v376
  %520 = vmatprep.subr.bf16.mxu0 0
  %521 = vmatpush1.bf16.msra.mxu0 %v377
  %522 = vmatprep.subr.bf16.mxu0 0
  %523 = vmatpush1.bf16.msra.mxu0 %v378
  %524 = vmatprep.subr.bf16.mxu0 0
  %525 = vmatpush1.bf16.msra.mxu0 %v379
  %526 = vmatprep.subr.bf16.mxu0 0
  %527 = vmatpush1.bf16.msra.mxu0 %v380
  %528 = vmatprep.subr.bf16.mxu0 0
  %529 = vmatpush1.bf16.msra.mxu0 %v381
  %530 = vmatprep.subr.bf16.mxu0 0
  %531 = vmatpush1.bf16.msra.mxu0 %v382
  %532 = vmatprep.subr.bf16.mxu0 0
  %533 = vmatpush1.bf16.msra.mxu0 %v383
  %534 = vmatprep.mubr.bf16.mxu0 %v175
  %535 = vmatmul.mubr.bf16.gmra.mrb[0].mxu0 %v174
  %v536 = vpop.f32.mrb[0].mxu0
  %v537 = vadd.f32 %v472, %v536
  %v538 = vpop.f32.mrb[0].mxu0
  %v539 = vpop.f32.mrb[0].mxu0
  %v540 = vadd.f32 %v475, %v539
  %v541 = vpop.f32.mrb[0].mxu0
  %542 = vmatprep.mubr.bf16.mxu0 %v180
  %543 = vmatmul.mubr.bf16.gmra.mrb[0].mxu0 %v179
  %v544 = vpop.f32.mrb[0].mxu0
  %v545 = vadd.f32 %v480, %v544
  %v546 = vpop.f32.mrb[0].mxu0
  %v547 = vpop.f32.mrb[0].mxu0
  %v548 = vadd.f32 %v483, %v547
  %v549 = vpop.f32.mrb[0].mxu0
  %550 = vmatprep.mubr.bf16.mxu0 %v185
  %551 = vmatmul.mubr.bf16.gmra.mrb[0].mxu0 %v184
  %v552 = vpop.f32.mrb[0].mxu0
  %v553 = vadd.f32 %v488, %v552
  %v554 = vpop.f32.mrb[0].mxu0
  %v555 = vpop.f32.mrb[0].mxu0
  %v556 = vadd.f32 %v491, %v555
  %v557 = vpop.f32.mrb[0].mxu0
  %558 = vmatprep.mubr.bf16.mxu0 %v190
  %559 = vmatmul.mubr.bf16.gmra.mrb[0].mxu0 %v189
  %v560 = vpop.f32.mrb[0].mxu0
  %v561 = vadd.f32 %v496, %v560
  %v562 = vpop.f32.mrb[0].mxu0
  %v563 = vpop.f32.mrb[0].mxu0
  %v564 = vadd.f32 %v499, %v563
  %v565 = vpop.f32.mrb[0].mxu0
  %566 = vdwg.mxu0
  %567 = vmatprep.subr.bf16.mxu0 0
  %568 = vmatpush1.bf16.msra.mxu0 %v384
  %569 = vmatprep.subr.bf16.mxu0 0
  %570 = vmatpush1.bf16.msra.mxu0 %v385
  %571 = vmatprep.subr.bf16.mxu0 0
  %572 = vmatpush1.bf16.msra.mxu0 %v386
  %573 = vmatprep.subr.bf16.mxu0 0
  %574 = vmatpush1.bf16.msra.mxu0 %v387
  %575 = vmatprep.subr.bf16.mxu0 0
  %576 = vmatpush1.bf16.msra.mxu0 0
  %577 = vmatprep.subr.bf16.mxu0 0
  %578 = vmatpush1.bf16.msra.mxu0 0
  %579 = vmatprep.subr.bf16.mxu0 0
  %580 = vmatpush1.bf16.msra.mxu0 0
  %581 = vmatprep.subr.bf16.mxu0 0
  %582 = vmatpush1.bf16.msra.mxu0 0
  %583 = vmatprep.subr.bf16.mxu0 0
  %584 = vmatpush1.bf16.msra.mxu0 0
  %585 = vmatprep.subr.bf16.mxu0 0
  %586 = vmatpush1.bf16.msra.mxu0 0
  %587 = vmatprep.subr.bf16.mxu0 0
  %588 = vmatpush1.bf16.msra.mxu0 0
  %589 = vmatprep.subr.bf16.mxu0 0
  %590 = vmatpush1.bf16.msra.mxu0 0
  %591 = vmatprep.subr.bf16.mxu0 0
  %592 = vmatpush1.bf16.msra.mxu0 0
  %593 = vmatprep.subr.bf16.mxu0 0
  %594 = vmatpush1.bf16.msra.mxu0 0
  %595 = vmatprep.subr.bf16.mxu0 0
  %596 = vmatpush1.bf16.msra.mxu0 0
  %597 = vmatprep.subr.bf16.mxu0 0
  %598 = vmatpush1.bf16.msra.mxu0 0
  %599 = vmatprep.mubr.bf16.mxu0 0
  %600 = vmatmul.mubr.bf16.gmra.mrb[0].mxu0 %v426
  %v601 = vpop.f32.mrb[0].mxu0
  %v602 = vadd.f32 %v537, %v601
  %v603 = vpop.f32.mrb[0].mxu0
  %v604 = vpop.f32.mrb[0].mxu0
  %v605 = vadd.f32 %v540, %v604
  %v606 = vpop.f32.mrb[0].mxu0
  %607 = vmatprep.mubr.bf16.mxu0 0
  %608 = vmatmul.mubr.bf16.gmra.mrb[0].mxu0 %v429
  %v609 = vpop.f32.mrb[0].mxu0
  %v610 = vadd.f32 %v545, %v609
  %v611 = vpop.f32.mrb[0].mxu0
  %v612 = vpop.f32.mrb[0].mxu0
  %v613 = vadd.f32 %v548, %v612
  %v614 = vpop.f32.mrb[0].mxu0
  %615 = vmatprep.mubr.bf16.mxu0 0
  %616 = vmatmul.mubr.bf16.gmra.mrb[0].mxu0 %v432
  %v617 = vpop.f32.mrb[0].mxu0
  %v618 = vadd.f32 %v553, %v617
  %v619 = vpop.f32.mrb[0].mxu0
  %v620 = vpop.f32.mrb[0].mxu0
  %v621 = vadd.f32 %v556, %v620
  %v622 = vpop.f32.mrb[0].mxu0
  %623 = vmatprep.mubr.bf16.mxu0 0
  %624 = vmatmul.mubr.bf16.gmra.mrb[0].mxu0 %v435
  %v625 = vpop.f32.mrb[0].mxu0
  %v626 = vadd.f32 %v561, %v625
  %v627 = vpop.f32.mrb[0].mxu0
  %v628 = vpop.f32.mrb[0].mxu0
  %v629 = vadd.f32 %v564, %v628
  %v630 = vpop.f32.mrb[0].mxu0
  %631 = vdwg.mxu0
  %v632 = vtanh.pop %v602
  %v633 = vtanh.pop %v605
  %v634 = vtanh.pop %v610
  %v635 = vtanh.pop %v613
  %v636 = vtanh.pop %v618
  %v637 = vtanh.pop %v621
  %v638 = vtanh.pop %v626
  %v639 = vtanh.pop %v629
  %v640 = vpack.c.bf16 %v633, %v632
  %v641 = vpack.c.bf16 %v635, %v634
  %v642 = vpack.c.bf16 %v637, %v636
  %v643 = vpack.c.bf16 %v639, %v638
  %v648 = vunpack.c.l.b16 %v640
  %v649 = vunpack.c.h.b16 %v640
  %v650 = vunpack.c.l.b16 %v641
  %v651 = vunpack.c.h.b16 %v641
  %v652 = vunpack.c.l.b16 %v642
  %v653 = vunpack.c.h.b16 %v642
  %v654 = vunpack.c.l.b16 %v643
  %v655 = vunpack.c.h.b16 %v643
  %v656 = vpack.c.b16 %v648, %v648
  %v657 = vpack.c.b16 %v649, %v649
  %v658 = vpack.c.b16 %v650, %v650
  %v659 = vpack.c.b16 %v651, %v651
  %v660 = vpack.c.b16 %v652, %v652
  %v661 = vpack.c.b16 %v653, %v653
  %v662 = vpack.c.b16 %v654, %v654
  %v663 = vpack.c.b16 %v655, %v655
  %672 = vst [vmem:[%s2] sm:$0xf] %v656
  %673 = vst [vmem:[%s2 + $0x4] sm:$0xf] %v657
  %674 = vst [vmem:[%s2 + $0x8] sm:$0xf] %v658
  %675 = vst [vmem:[%s2 + $0xc] sm:$0xf] %v659
  %676 = vst [vmem:[%s2 + $0x10] sm:$0xf] %v660
  %677 = vst [vmem:[%s2 + $0x14] sm:$0xf] %v661
  %678 = vst [vmem:[%s2 + $0x18] sm:$0xf] %v662
  %679 = vst [vmem:[%s2 + $0x1c] sm:$0xf] %v663
  // Predicated region
  $region10: #{cifar_gen_forward.13} parent=0 // pred_check
    _
  $region11: #{cifar_gen_forward.13} parent=0 // pred_check_branch
    %681 = sbr.rel (0) target = $region13
  $region12: #{cifar_gen_forward.13} parent=0 // pred_region
    _
  $region13: #{cifar_gen_forward.13} parent=0 // pred_fallthru
    _
  // Predicated region
  $region14: #{cifar_gen_forward.13} parent=0 // pred_check
    _
  $region15: #{cifar_gen_forward.13} parent=0 // pred_check_branch
    %683 = sbr.rel (0) target = $region17
  $region16: #{cifar_gen_forward.13} parent=0 // pred_region
    _
  $region17: #{cifar_gen_forward.13} parent=0 // pred_fallthru
    _

</llo_original>
